<compile_context>
chip_gen: v6e
topology: v6e:2x2x1
jax: 0.10.0
libtpu: 0.0.40
codegen_flags: <defaults>
</compile_context>

<pallas_src>
import jax
import jax.numpy as jnp
from jax.experimental import pallas as pl
from jax.experimental.pallas import tpu as pltpu


N_LAYER1 = 128
N_LAYER2 = 256
N_ACTIONS = 26        # len(actions_space) after .pop(13)
N_OUT_PAD = 128       # lane-dense padded output width (zero-padded columns 26..127)

_TB_MAX = 2048        # max batch tile for the gridded path (few-MiB VMEM footprint)

_PRECISION = jax.lax.Precision.HIGHEST   # true f32 matmuls (matches PyTorch numerics)


def _device_kind():
    try:
        return jax.devices()[0].device_kind.lower()
    except Exception:
        return ""


# v7x has 2 TensorCores per chip: route 512 < batch <= 1024 through the gridded
# ("parallel") path so both cores participate; v5e/v6e keep the larger cutoff.
_SMALL_BATCH = 512 if "v7" in _device_kind() else 1024


# ----------------------------------------------------------------------------- kernels

def _mlp(x, w1, b1, w2, b2, w3, b3):
    """relu(x @ W1 + b1) -> relu(. @ W2 + b2) -> . @ W3 + b3  (all f32, HIGHEST)."""
    h1 = jnp.dot(x, w1, preferred_element_type=jnp.float32, precision=_PRECISION) + b1
    h1 = jnp.maximum(h1, 0.0)
    h2 = jnp.dot(h1, w2, preferred_element_type=jnp.float32, precision=_PRECISION) + b2
    h2 = jnp.maximum(h2, 0.0)
    return jnp.dot(h2, w3, preferred_element_type=jnp.float32, precision=_PRECISION) + b3


def _qvalues_kernel(x_ref, w1_ref, b1_ref, w2_ref, b2_ref, w3_ref, b3_ref, out_ref):
    out_ref[...] = _mlp(x_ref[...], w1_ref[...], b1_ref[...], w2_ref[...],
                        b2_ref[...], w3_ref[...], b3_ref[...])


def _best_action_kernel(x_ref, w1_ref, b1_ref, w2_ref, b2_ref, w3_ref, b3_ref, act_ref):
    """Fused forward + greedy argmax over the 26 valid action columns -> int32 index."""
    q = _mlp(x_ref[...], w1_ref[...], b1_ref[...], w2_ref[...],
             b2_ref[...], w3_ref[...], b3_ref[...])
    col = jax.lax.broadcasted_iota(jnp.int32, q.shape, 1)
    qv = jnp.where(col < N_ACTIONS, q, -jnp.inf)          # mask zero-padded columns
    qmax = jnp.max(qv, axis=-1, keepdims=True)
    # First-occurrence argmax via a float lane-min (keeps reductions on well-trodden paths).
    idx = jnp.where(qv == qmax, col.astype(jnp.float32), jnp.float32(q.shape[-1]))
    act_ref[...] = jnp.min(idx, axis=-1, keepdims=True).astype(jnp.int32)


# ----------------------------------------------------------------------------- dispatch

def _pick_tile(batch):
    # At least two grid steps (amortize per-step overhead, engage both v7x TCs),
    # rounded up to a 512-row multiple, capped so VMEM stays a few MiB.
    half = pl.cdiv(batch, 2)
    return max(512, min(_TB_MAX, pl.cdiv(half, 512) * 512))


def _run(kernel, state_t, params, out_width, out_dtype):
    batch, state_dim = state_t.shape
    n_pad = params[4].shape[1]   # padded output width of W3
    out_shape = jax.ShapeDtypeStruct((batch, out_width), out_dtype)

    if batch <= _SMALL_BATCH:
        # Single un-gridded invocation: every operand is a full-array VMEM block.
        # No grid / software-pipeline per-step overhead on a launch-bound kernel.
        vmem = pl.BlockSpec(memory_space=pltpu.MemorySpace.VMEM)
        return pl.pallas_call(
            kernel, out_shape=out_shape, in_specs=[vmem] * 7, out_specs=vmem,
        )(state_t, *params)

    # Batch-tiled path: stream activations; weights/biases use constant index_maps so
    # they stay VMEM-resident across grid steps.  A ragged last block (batch not a
    # multiple of tb) is masked by Pallas -- no wrapper-side pad/crop copies needed.
    tb = _pick_tile(batch)
    const = lambda shape: pl.BlockSpec(shape, lambda i: (0, 0))
    return pl.pallas_call(
        kernel,
        out_shape=out_shape,
        grid=(pl.cdiv(batch, tb),),
        in_specs=[
            pl.BlockSpec((tb, state_dim), lambda i: (i, 0)),
            const((state_dim, N_LAYER1)),
            const((1, N_LAYER1)),
            const((N_LAYER1, N_LAYER2)),
            const((1, N_LAYER2)),
            const((N_LAYER2, n_pad)),
            const((1, n_pad)),
        ],
        out_specs=pl.BlockSpec((tb, out_width), lambda i: (i, 0)),
        compiler_params=pltpu.CompilerParams(
            dimension_semantics=("parallel",)   # v7x: split batch across both TCs
        ),
    )(state_t, *params)


# ----------------------------------------------------------------------------- public API

@jax.jit
def reinf_forward_padded(state_t, w1, b1, w2, b2, w3, b3):
    """Lane-dense padded qvalues [batch, N_OUT_PAD]; columns >= N_ACTIONS are exactly 0.

    Preferred for consumers (e.g. a fused training loss) that can ignore/mask the
    padded columns themselves and thus skip the extra XLA slice copy.
    """
    return _run(_qvalues_kernel, state_t, (w1, b1, w2, b2, w3, b3),
                w3.shape[1], jnp.float32)


@jax.jit
def reinf_forward(state_t, w1, b1, w2, b2, w3, b3):
    """Module-faithful REINF.forward: qvalues [batch, N_ACTIONS] float32."""
    return reinf_forward_padded(state_t, w1, b1, w2, b2, w3, b3)[:, :N_ACTIONS]


@jax.jit
def reinf_best_actions(state_t, w1, b1, w2, b2, w3, b3):
    """Fused greedy action selection: argmax_a Q(s, a) as [batch, 1] int32.

    Used by the inference/rollout path (play / sample_actions greedy branch) so the
    padded qvalue matrix never has to be written to HBM at all.
    """
    return _run(_best_action_kernel, state_t, (w1, b1, w2, b2, w3, b3), 1, jnp.int32)


# TODO(synk): epsilon-greedy exploration randomness, softmax sampling in
# generate_trajectory, and the numpy action-space bookkeeping (create_actions_space /
# get_action_index), plus checkpoint loading & plotting, remain host-side as in the
# original module; only forward() (and its greedy-argmax fusion) are Pallas kernels.


# ----------------------------------------------------------------------------- params / ref

def init_params(key, state_dim):
    """Deterministic init mimicking nn.Linear's U(-1/sqrt(fan_in), 1/sqrt(fan_in)).

    Weights are stored as [in_features, out_features] (transposed vs. PyTorch).
    Biases are stored as [1, out_features] for 2-D TPU layout.
    The final layer is zero-padded from N_ACTIONS to N_OUT_PAD output columns.
    """
    def linear(key, fan_in, fan_out, out_pad=None):
        kw, kb = jax.random.split(key)
        bound = fan_in ** -0.5
        w = jax.random.uniform(kw, (fan_in, fan_out), jnp.float32, -bound, bound)
        b = jax.random.uniform(kb, (1, fan_out), jnp.float32, -bound, bound)
        if out_pad is not None and out_pad > fan_out:
            w = jnp.pad(w, ((0, 0), (0, out_pad - fan_out)))
            b = jnp.pad(b, ((0, 0), (0, out_pad - fan_out)))
        return w, b

    k1, k2, k3 = jax.random.split(key, 3)
    w1, b1 = linear(k1, state_dim, N_LAYER1)
    w2, b2 = linear(k2, N_LAYER1, N_LAYER2)
    w3, b3 = linear(k3, N_LAYER2, N_ACTIONS, out_pad=N_OUT_PAD)
    return w1, b1, w2, b2, w3, b3


def reference_forward(state_t, w1, b1, w2, b2, w3, b3):
    """Pure-JAX reference (true-f32 precision, padded w3/b3, sliced back)."""
    h1 = jnp.maximum(
        jnp.dot(state_t, w1, precision=_PRECISION) + b1, 0.0)
    h2 = jnp.maximum(
        jnp.dot(h1, w2, precision=_PRECISION) + b2, 0.0)
    return (jnp.dot(h2, w3, precision=_PRECISION) + b3)[:, :N_ACTIONS]


# ----------------------------------------------------------------------------- self-test

if __name__ == "__main__":
    key = jax.random.PRNGKey(0)
    k_params, k_small, k_large = jax.random.split(key, 3)

    state_dim = 32  # REINF(state_shape=32, ...)
    params = init_params(k_params, state_dim)

    # 1) Small-batch path (single-env rollout style): no grid, all operands in VMEM.
    x_small = jax.random.normal(k_small, (8, state_dim), jnp.float32)
    q_small = jax.block_until_ready(reinf_forward(x_small, *params))
    ref_small = reference_forward(x_small, *params)
    assert q_small.shape == (8, N_ACTIONS)
    assert jnp.allclose(q_small, ref_small, atol=1e-4, rtol=1e-4), "small-batch mismatch"

    a_small = jax.block_until_ready(reinf_best_actions(x_small, *params))
    assert a_small.shape == (8, 1)
    assert jnp.array_equal(a_small[:, 0], jnp.argmax(ref_small, axis=-1)), \
        "small-batch fused argmax mismatch"

    # 2) Large-batch path (training / batched rollout): batch-tiled grid with a ragged
    #    last block (no wrapper-side pad/crop copies).
    x_large = jax.random.normal(k_large, (1288, state_dim), jnp.float32)
    q_large = jax.block_until_ready(reinf_forward(x_large, *params))
    ref_large = reference_forward(x_large, *params)
    assert q_large.shape == (1288, N_ACTIONS)
    assert jnp.allclose(q_large, ref_large, atol=1e-4, rtol=1e-4), "large-batch mismatch"

    a_large = jax.block_until_ready(reinf_best_actions(x_large, *params))
    assert a_large.shape == (1288, 1)
    assert jnp.array_equal(a_large[:, 0], jnp.argmax(ref_large, axis=-1)), \
        "large-batch fused argmax mismatch"

    print("KERNEL_OK")
</pallas_src>

<mosaic_0001>
module attributes {stable_mosaic.version = 11 : i64} {
  func.func @_qvalues_kernel(%arg0: memref<8x32xf32, #tpu.memory_space<vmem>>, %arg1: memref<32x128xf32, #tpu.memory_space<vmem>>, %arg2: memref<1x128xf32, #tpu.memory_space<vmem>>, %arg3: memref<128x256xf32, #tpu.memory_space<vmem>>, %arg4: memref<1x256xf32, #tpu.memory_space<vmem>>, %arg5: memref<256x128xf32, #tpu.memory_space<vmem>>, %arg6: memref<1x128xf32, #tpu.memory_space<vmem>>, %arg7: memref<8x128xf32, #tpu.memory_space<vmem>>) attributes {dimension_semantics = [], scalar_prefetch = 0 : i64, scratch_operands = 0 : i64, tpu.core_type = #tpu.core_type<tc>} {
    %c0 = arith.constant 0 : index
    %c0_0 = arith.constant 0 : index
    %0 = vector.load %arg0[%c0, %c0_0] : memref<8x32xf32, #tpu.memory_space<vmem>>, vector<8x32xf32>
    %c0_1 = arith.constant 0 : index
    %c0_2 = arith.constant 0 : index
    %1 = vector.load %arg1[%c0_1, %c0_2] : memref<32x128xf32, #tpu.memory_space<vmem>>, vector<32x128xf32>
    %c0_3 = arith.constant 0 : index
    %c0_4 = arith.constant 0 : index
    %2 = vector.load %arg2[%c0_3, %c0_4] : memref<1x128xf32, #tpu.memory_space<vmem>>, vector<1x128xf32>
    %c0_5 = arith.constant 0 : index
    %c0_6 = arith.constant 0 : index
    %3 = vector.load %arg3[%c0_5, %c0_6] : memref<128x256xf32, #tpu.memory_space<vmem>>, vector<128x256xf32>
    %c0_7 = arith.constant 0 : index
    %c0_8 = arith.constant 0 : index
    %4 = vector.load %arg4[%c0_7, %c0_8] : memref<1x256xf32, #tpu.memory_space<vmem>>, vector<1x256xf32>
    %c0_9 = arith.constant 0 : index
    %c0_10 = arith.constant 0 : index
    %5 = vector.load %arg5[%c0_9, %c0_10] : memref<256x128xf32, #tpu.memory_space<vmem>>, vector<256x128xf32>
    %c0_11 = arith.constant 0 : index
    %c0_12 = arith.constant 0 : index
    %6 = vector.load %arg6[%c0_11, %c0_12] : memref<1x128xf32, #tpu.memory_space<vmem>>, vector<1x128xf32>
    %cst = arith.constant dense<0.000000e+00> : vector<8x128xf32>
    %7 = tpu.matmul %0, %1, %cst {dimension_numbers = #tpu.dot_dimension_numbers<[1], [0], [0], [1], [0, 0, 1, 1], [], []>, precision = #tpu.contract_precision<fp32>} : vector<8x32xf32>, vector<32x128xf32>, vector<8x128xf32> -> vector<8x128xf32>
    %8 = vector.broadcast %2 : vector<1x128xf32> to vector<8x128xf32>
    %9 = arith.addf %7, %8 : vector<8x128xf32>
    %cst_13 = arith.constant 0.000000e+00 : f32
    %10 = vector.broadcast %cst_13 : f32 to vector<8x128xf32>
    %11 = arith.maximumf %9, %10 : vector<8x128xf32>
    %cst_14 = arith.constant dense<0.000000e+00> : vector<8x256xf32>
    %12 = tpu.matmul %11, %3, %cst_14 {dimension_numbers = #tpu.dot_dimension_numbers<[1], [0], [0], [1], [0, 0, 1, 1], [], []>, precision = #tpu.contract_precision<fp32>} : vector<8x128xf32>, vector<128x256xf32>, vector<8x256xf32> -> vector<8x256xf32>
    %13 = vector.broadcast %4 : vector<1x256xf32> to vector<8x256xf32>
    %14 = arith.addf %12, %13 : vector<8x256xf32>
    %cst_15 = arith.constant 0.000000e+00 : f32
    %15 = vector.broadcast %cst_15 : f32 to vector<8x256xf32>
    %16 = arith.maximumf %14, %15 : vector<8x256xf32>
    %cst_16 = arith.constant dense<0.000000e+00> : vector<8x128xf32>
    %17 = tpu.matmul %16, %5, %cst_16 {dimension_numbers = #tpu.dot_dimension_numbers<[1], [0], [0], [1], [0, 0, 1, 1], [], []>, precision = #tpu.contract_precision<fp32>} : vector<8x256xf32>, vector<256x128xf32>, vector<8x128xf32> -> vector<8x128xf32>
    %18 = vector.broadcast %6 : vector<1x128xf32> to vector<8x128xf32>
    %19 = arith.addf %17, %18 : vector<8x128xf32>
    %c0_17 = arith.constant 0 : index
    %c0_18 = arith.constant 0 : index
    %20 = vector.load %arg7[%c0_17, %c0_18] : memref<8x128xf32, #tpu.memory_space<vmem>>, vector<8x128xf32>
    tpu.vector_store %arg7[%c0_17, %c0_18], %19 {strides = array<i32>} : memref<8x128xf32, #tpu.memory_space<vmem>>, vector<8x128xf32>,
    return
  }
}

</mosaic_0001>

<llo_original>
// kernel: reinf_forward_padded.1
$region0: #{reinf_forward_padded.1}
  #allocation0 [shape = 'u32[]', space=smem, size = 0x4, offset = 0x4, fixed_abs, tag = 'smem constant byte address 0x4 - core index']
  #allocation1 [shape = 'u32[144,128]{1,0:T(1,128)}', space=vmem, size = 0x12000, scoped, tag = 'internal scratch']
  %s0 = inlined_call_operand.hbm [shape: f32[8,32], index: 0, kind: input, shape index: {}]
  %s1 = inlined_call_operand.hbm [shape: f32[32,128], index: 1, kind: input, shape index: {}]
  %s2 = inlined_call_operand.vmem [shape: f32[1,128], index: 2, kind: input, shape index: {}]
  %s3 = inlined_call_operand.hbm [shape: f32[128,256], index: 3, kind: input, shape index: {}]
  %s4 = inlined_call_operand.vmem [shape: f32[1,256], index: 4, kind: input, shape index: {}]
  %s5 = inlined_call_operand.hbm [shape: f32[256,128], index: 5, kind: input, shape index: {}]
  %s6 = inlined_call_operand.vmem [shape: f32[1,128], index: 6, kind: input, shape index: {}]
  %s7 = inlined_call_operand.hbm [shape: f32[8,128], index: 7, kind: output, shape index: {}]
  %s8 = sld [smem:[#allocation0]]
  $region54: #{reinf_forward_padded.1} parent=0
    _
  %s10 = ssub.s32 1, %s8
  %s11 = scalar_select 0, %s10, %s8
  $region1: #{reinf_forward_padded.1} parent=0
    #allocation2 [shape = 'u8[4096]{0}', space=vmem, size = 0x1000, scoped, tag = 'input window, operand 0, single buffered']
    #allocation3 [shape = 's32[1]{0}', space=sflag, size = 0x4, scoped, tag = 'scoped memory for reinf_forward_padded.1']
    #allocation4 [shape = 's32[1]{0}', space=sflag, size = 0x4, scoped, tag = 'scoped memory for reinf_forward_padded.1']
    #allocation5 [shape = 'u8[16384]{0}', space=vmem, size = 0x4000, scoped, tag = 'input window, operand 1, single buffered']
    #allocation6 [shape = 's32[1]{0}', space=sflag, size = 0x4, scoped, tag = 'scoped memory for reinf_forward_padded.1']
    #allocation7 [shape = 'u8[131072]{0}', space=vmem, size = 0x20000, scoped, tag = 'input window, operand 3, single buffered']
    #allocation8 [shape = 'u8[131072]{0}', space=vmem, size = 0x20000, scoped, tag = 'input window, operand 5, single buffered']
    #allocation9 [shape = 's32[1]{0}', space=sflag, size = 0x4, scoped, tag = 'scoped memory for reinf_forward_padded.1']
    #allocation10 [shape = 'u8[4096]{0}', space=vmem, size = 0x1000, scoped, tag = 'output window, operand 0, single buffered']
    %12 = vsyncpa [#allocation3], 0
    %13 = vsyncpa [#allocation6], 0
    %14 = vsyncpa [#allocation9], 0
    %15 = vsyncpa [#allocation4], 0
    // Predicated region
    $region2: #{reinf_forward_padded.1} parent=1 // pred_check
      _
    $region3: #{reinf_forward_padded.1} parent=1 // pred_check_branch
      %17 = sbr.rel (0) target = $region5
    $region4: #{reinf_forward_padded.1} parent=1 // pred_region
      %s19 = ssub.s32 128, 128
      %20 = vsyncadd [#allocation3], %s19
      %s22 = sshll.u32 [#allocation2], 4
      %s23 = int_to_ptr.vmem [resolvable:$true] %s22
      %25 = dma.hbm_to_vmem [thread:$0]  %s0, 128, %s23, [#allocation3]
    $region5: #{reinf_forward_padded.1} parent=1 // pred_fallthru
      _
    // Predicated region
    $region6: #{reinf_forward_padded.1} parent=1 // pred_check
      _
    $region7: #{reinf_forward_padded.1} parent=1 // pred_check_branch
      %27 = sbr.rel (0) target = $region9
    $region8: #{reinf_forward_padded.1} parent=1 // pred_region
      %s29 = ssub.s32 512, 512
      %30 = vsyncadd [#allocation6], %s29
      %s31 = sshll.u32 [#allocation5], 4
      %s32 = int_to_ptr.vmem [resolvable:$true] %s31
      %37 = dma.hbm_to_vmem [thread:$0]  %s1, 512, %s32, [#allocation6], 128, 128, 8
    $region9: #{reinf_forward_padded.1} parent=1 // pred_fallthru
      _
    // Predicated region
    $region10: #{reinf_forward_padded.1} parent=1 // pred_check
      _
    $region11: #{reinf_forward_padded.1} parent=1 // pred_check_branch
      %39 = sbr.rel (0) target = $region13
    $region12: #{reinf_forward_padded.1} parent=1 // pred_region
      _
    $region13: #{reinf_forward_padded.1} parent=1 // pred_fallthru
      _
    // Predicated region
    $region14: #{reinf_forward_padded.1} parent=1 // pred_check
      _
    $region15: #{reinf_forward_padded.1} parent=1 // pred_check_branch
      %41 = sbr.rel (0) target = $region17
    $region16: #{reinf_forward_padded.1} parent=1 // pred_region
      %s43 = ssub.s32 4096, 4096
      %44 = vsyncadd [#allocation6], %s43
      %s45 = sshll.u32 [#allocation7], 4
      %s46 = int_to_ptr.vmem [resolvable:$true] %s45
      %51 = dma.hbm_to_vmem [thread:$0]  %s3, 4096, %s46, [#allocation6], 256, 256, 16
    $region17: #{reinf_forward_padded.1} parent=1 // pred_fallthru
      _
    // Predicated region
    $region18: #{reinf_forward_padded.1} parent=1 // pred_check
      _
    $region19: #{reinf_forward_padded.1} parent=1 // pred_check_branch
      %53 = sbr.rel (0) target = $region21
    $region20: #{reinf_forward_padded.1} parent=1 // pred_region
      _
    $region21: #{reinf_forward_padded.1} parent=1 // pred_fallthru
      _
    // Predicated region
    $region22: #{reinf_forward_padded.1} parent=1 // pred_check
      _
    $region23: #{reinf_forward_padded.1} parent=1 // pred_check_branch
      %55 = sbr.rel (0) target = $region25
    $region24: #{reinf_forward_padded.1} parent=1 // pred_region
      %s57 = ssub.s32 4096, 4096
      %58 = vsyncadd [#allocation9], %s57
      %s59 = sshll.u32 [#allocation8], 4
      %s60 = int_to_ptr.vmem [resolvable:$true] %s59
      %65 = dma.hbm_to_vmem [thread:$0]  %s5, 4096, %s60, [#allocation9], 128, 128, 8
    $region25: #{reinf_forward_padded.1} parent=1 // pred_fallthru
      _
    // Predicated region
    $region26: #{reinf_forward_padded.1} parent=1 // pred_check
      _
    $region27: #{reinf_forward_padded.1} parent=1 // pred_check_branch
      %67 = sbr.rel (0) target = $region29
    $region28: #{reinf_forward_padded.1} parent=1 // pred_region
      _
    $region29: #{reinf_forward_padded.1} parent=1 // pred_fallthru
      _
    // Predicated region
    $region30: #{reinf_forward_padded.1} parent=1 // pred_check
      _
    $region31: #{reinf_forward_padded.1} parent=1 // pred_check_branch
      %69 = sbr.rel (0) target = $region33
    $region32: #{reinf_forward_padded.1} parent=1 // pred_region
      %70 = dma.done [#allocation3], 128
    $region33: #{reinf_forward_padded.1} parent=1 // pred_fallthru
      _
    // Predicated region
    $region34: #{reinf_forward_padded.1} parent=1 // pred_check
      _
    $region35: #{reinf_forward_padded.1} parent=1 // pred_check_branch
      %72 = sbr.rel (0) target = $region37
    $region36: #{reinf_forward_padded.1} parent=1 // pred_region
      %73 = dma.done [#allocation6], 512
    $region37: #{reinf_forward_padded.1} parent=1 // pred_fallthru
      _
    // Predicated region
    $region38: #{reinf_forward_padded.1} parent=1 // pred_check
      _
    $region39: #{reinf_forward_padded.1} parent=1 // pred_check_branch
      %75 = sbr.rel (0) target = $region41
    $region40: #{reinf_forward_padded.1} parent=1 // pred_region
      %76 = dma.done [#allocation6], 4096
    $region41: #{reinf_forward_padded.1} parent=1 // pred_fallthru
      _
    // Predicated region
    $region42: #{reinf_forward_padded.1} parent=1 // pred_check
      _
    $region43: #{reinf_forward_padded.1} parent=1 // pred_check_branch
      %78 = sbr.rel (0) target = $region45
    $region44: #{reinf_forward_padded.1} parent=1 // pred_region
      %79 = dma.done [#allocation9], 4096
    $region45: #{reinf_forward_padded.1} parent=1 // pred_fallthru
      _
    %v80 = vld [vmem:[#allocation2] sm:$0xff]
    %v81 = vld [vmem:[#allocation5] sm:$0xff]
    %v82 = vld [vmem:[#allocation5 + $0x8] sm:$0xff]
    %v83 = vld [vmem:[#allocation5 + $0x10] sm:$0xff]
    %v84 = vld [vmem:[#allocation5 + $0x18] sm:$0xff]
    %v85 = vld [vmem:[%s2] sm:$0x1]
    %v86 = vld [vmem:[#allocation7] sm:$0xff]
    %v87 = vld [vmem:[#allocation7 + $0x8] sm:$0xff]
    %v88 = vld [vmem:[#allocation7 + $0x10] sm:$0xff]
    %v89 = vld [vmem:[#allocation7 + $0x18] sm:$0xff]
    %v90 = vld [vmem:[#allocation7 + $0x20] sm:$0xff]
    %v91 = vld [vmem:[#allocation7 + $0x28] sm:$0xff]
    %v92 = vld [vmem:[#allocation7 + $0x30] sm:$0xff]
    %v93 = vld [vmem:[#allocation7 + $0x38] sm:$0xff]
    %v94 = vld [vmem:[#allocation7 + $0x40] sm:$0xff]
    %v95 = vld [vmem:[#allocation7 + $0x48] sm:$0xff]
    %v96 = vld [vmem:[#allocation7 + $0x50] sm:$0xff]
    %v97 = vld [vmem:[#allocation7 + $0x58] sm:$0xff]
    %v98 = vld [vmem:[#allocation7 + $0x60] sm:$0xff]
    %v99 = vld [vmem:[#allocation7 + $0x68] sm:$0xff]
    %v100 = vld [vmem:[#allocation7 + $0x70] sm:$0xff]
    %v101 = vld [vmem:[#allocation7 + $0x78] sm:$0xff]
    %v102 = vld [vmem:[#allocation7 + $0x80] sm:$0xff]
    %v103 = vld [vmem:[#allocation7 + $0x88] sm:$0xff]
    %v104 = vld [vmem:[#allocation7 + $0x90] sm:$0xff]
    %v105 = vld [vmem:[#allocation7 + $0x98] sm:$0xff]
    %v106 = vld [vmem:[#allocation7 + $0xa0] sm:$0xff]
    %v107 = vld [vmem:[#allocation7 + $0xa8] sm:$0xff]
    %v108 = vld [vmem:[#allocation7 + $0xb0] sm:$0xff]
    %v109 = vld [vmem:[#allocation7 + $0xb8] sm:$0xff]
    %v110 = vld [vmem:[#allocation7 + $0xc0] sm:$0xff]
    %v111 = vld [vmem:[#allocation7 + $0xc8] sm:$0xff]
    %v112 = vld [vmem:[#allocation7 + $0xd0] sm:$0xff]
    %v113 = vld [vmem:[#allocation7 + $0xd8] sm:$0xff]
    %v114 = vld [vmem:[#allocation7 + $0xe0] sm:$0xff]
    %v115 = vld [vmem:[#allocation7 + $0xe8] sm:$0xff]
    %v116 = vld [vmem:[#allocation7 + $0xf0] sm:$0xff]
    %v117 = vld [vmem:[#allocation7 + $0xf8] sm:$0xff]
    %v118 = vld [vmem:[%s4] sm:$0x3]
    %v119 = vld [vmem:[#allocation8] sm:$0xff]
    %v120 = vld [vmem:[#allocation8 + $0x8] sm:$0xff]
    %v121 = vld [vmem:[#allocation8 + $0x10] sm:$0xff]
    %v122 = vld [vmem:[#allocation8 + $0x18] sm:$0xff]
    %v123 = vld [vmem:[#allocation8 + $0x20] sm:$0xff]
    %v124 = vld [vmem:[#allocation8 + $0x28] sm:$0xff]
    %v125 = vld [vmem:[#allocation8 + $0x30] sm:$0xff]
    %v126 = vld [vmem:[#allocation8 + $0x38] sm:$0xff]
    %v127 = vld [vmem:[#allocation8 + $0x40] sm:$0xff]
    %v128 = vld [vmem:[#allocation8 + $0x48] sm:$0xff]
    %v129 = vld [vmem:[#allocation8 + $0x50] sm:$0xff]
    %v130 = vld [vmem:[#allocation8 + $0x58] sm:$0xff]
    %v131 = vld [vmem:[#allocation8 + $0x60] sm:$0xff]
    %v132 = vld [vmem:[#allocation8 + $0x68] sm:$0xff]
    %v133 = vld [vmem:[#allocation8 + $0x70] sm:$0xff]
    %v134 = vld [vmem:[#allocation8 + $0x78] sm:$0xff]
    %v135 = vld [vmem:[#allocation8 + $0x80] sm:$0xff]
    %v136 = vld [vmem:[#allocation8 + $0x88] sm:$0xff]
    %v137 = vld [vmem:[#allocation8 + $0x90] sm:$0xff]
    %v138 = vld [vmem:[#allocation8 + $0x98] sm:$0xff]
    %v139 = vld [vmem:[#allocation8 + $0xa0] sm:$0xff]
    %v140 = vld [vmem:[#allocation8 + $0xa8] sm:$0xff]
    %v141 = vld [vmem:[#allocation8 + $0xb0] sm:$0xff]
    %v142 = vld [vmem:[#allocation8 + $0xb8] sm:$0xff]
    %v143 = vld [vmem:[#allocation8 + $0xc0] sm:$0xff]
    %v144 = vld [vmem:[#allocation8 + $0xc8] sm:$0xff]
    %v145 = vld [vmem:[#allocation8 + $0xd0] sm:$0xff]
    %v146 = vld [vmem:[#allocation8 + $0xd8] sm:$0xff]
    %v147 = vld [vmem:[#allocation8 + $0xe0] sm:$0xff]
    %v148 = vld [vmem:[#allocation8 + $0xe8] sm:$0xff]
    %v149 = vld [vmem:[#allocation8 + $0xf0] sm:$0xff]
    %v150 = vld [vmem:[#allocation8 + $0xf8] sm:$0xff]
    %v151 = vld [vmem:[%s6] sm:$0x1]
    %v153 = vlaneseq
    %v154 = vshrl.u32 %v153, 7
    %v155 = vsub.s32 0, %v154
    %v156 = vrot.slane %v85, %v155
    %vm158 = vcmask 261120
    %v160 = vsel %vm158, %v80, 0
    %162 = vmatprep.subr.mxu0 0.0
    %163 = vmatpush1.msra.mxu0 0.0
    %164 = vmatprep.subr.mxu0 0.0
    %165 = vmatpush1.msra.mxu0 0.0
    %166 = vmatprep.subr.mxu0 0.0
    %167 = vmatpush1.msra.mxu0 0.0
    %168 = vmatprep.subr.mxu0 0.0
    %169 = vmatpush1.msra.mxu0 0.0
    %170 = vmatprep.subr.mxu0 0.0
    %171 = vmatpush1.msra.mxu0 0.0
    %172 = vmatprep.subr.mxu0 0.0
    %173 = vmatpush1.msra.mxu0 0.0
    %174 = vmatprep.subr.mxu0 0.0
    %175 = vmatpush1.msra.mxu0 0.0
    %176 = vmatprep.subr.mxu0 0.0
    %177 = vmatpush1.msra.mxu0 0.0
    %178 = vmatprep.subr.mxu0 0.0
    %179 = vmatpush1.msra.mxu0 0.0
    %180 = vmatprep.subr.mxu0 0.0
    %181 = vmatpush1.msra.mxu0 0.0
    %182 = vmatprep.subr.mxu0 0.0
    %183 = vmatpush1.msra.mxu0 0.0
    %184 = vmatprep.subr.mxu0 0.0
    %185 = vmatpush1.msra.mxu0 0.0
    %186 = vmatprep.subr.mxu0 0.0
    %v187 = vand.u32 %v84, 4294901760
    %188 = vmatpush1.msra.mxu0 %v187
    %189 = vmatprep.subr.mxu0 0.0
    %v190 = vand.u32 %v83, 4294901760
    %191 = vmatpush1.msra.mxu0 %v190
    %192 = vmatprep.subr.mxu0 0.0
    %v193 = vand.u32 %v82, 4294901760
    %194 = vmatpush1.msra.mxu0 %v193
    %195 = vmatprep.subr.mxu0 0.0
    %v196 = vand.u32 %v81, 4294901760
    %197 = vmatpush1.msra.mxu0 %v196
    %198 = vmatprep.subr.mxu0 0.0
    %199 = vmatpush2.msra.mxu0 0.0
    %200 = vmatprep.subr.mxu0 0.0
    %201 = vmatpush2.msra.mxu0 0.0
    %202 = vmatprep.subr.mxu0 0.0
    %203 = vmatpush2.msra.mxu0 0.0
    %204 = vmatprep.subr.mxu0 0.0
    %205 = vmatpush2.msra.mxu0 0.0
    %206 = vmatprep.subr.mxu0 0.0
    %207 = vmatpush2.msra.mxu0 0.0
    %208 = vmatprep.subr.mxu0 0.0
    %209 = vmatpush2.msra.mxu0 0.0
    %210 = vmatprep.subr.mxu0 0.0
    %211 = vmatpush2.msra.mxu0 0.0
    %212 = vmatprep.subr.mxu0 0.0
    %213 = vmatpush2.msra.mxu0 0.0
    %214 = vmatprep.subr.mxu0 0.0
    %215 = vmatpush2.msra.mxu0 0.0
    %216 = vmatprep.subr.mxu0 0.0
    %217 = vmatpush2.msra.mxu0 0.0
    %218 = vmatprep.subr.mxu0 0.0
    %219 = vmatpush2.msra.mxu0 0.0
    %220 = vmatprep.subr.mxu0 0.0
    %221 = vmatpush2.msra.mxu0 0.0
    %222 = vmatprep.subr.mxu0 0.0
    %223 = vmatpush2.msra.mxu0 0.0
    %224 = vmatprep.subr.mxu0 0.0
    %225 = vmatpush2.msra.mxu0 0.0
    %226 = vmatprep.subr.mxu0 0.0
    %227 = vmatpush2.msra.mxu0 0.0
    %228 = vmatprep.subr.mxu0 0.0
    %229 = vmatpush2.msra.mxu0 0.0
    %230 = vmatprep.mubr.f32.mxu0 0.0
    %v231 = vand.u32 %v160, 4294901760
    %v232 = vsub.f32 %v160, %v231
    %v233 = vand.u32 %v232, 4294901760
    %v234 = vsub.f32 %v232, %v233
    %v235 = vand.u32 %v234, 4294901760
    %236 = vmatmul.mubr.f32.gmra.mxu0 %v235
    %v237 = vpop.f32.mrf.mxu0
    %v238 = vadd.f32 %v156, %v237
    %v239 = vpop.f32.mrf.mxu0
    %240 = vdwg.mxu0
    %241 = vmatprep.subr.mxu0 0.0
    %242 = vmatpush1.msra.mxu0 0.0
    %243 = vmatprep.subr.mxu0 0.0
    %244 = vmatpush1.msra.mxu0 0.0
    %245 = vmatprep.subr.mxu0 0.0
    %246 = vmatpush1.msra.mxu0 0.0
    %247 = vmatprep.subr.mxu0 0.0
    %248 = vmatpush1.msra.mxu0 0.0
    %249 = vmatprep.subr.mxu0 0.0
    %250 = vmatpush1.msra.mxu0 0.0
    %251 = vmatprep.subr.mxu0 0.0
    %252 = vmatpush1.msra.mxu0 0.0
    %253 = vmatprep.subr.mxu0 0.0
    %254 = vmatpush1.msra.mxu0 0.0
    %255 = vmatprep.subr.mxu0 0.0
    %256 = vmatpush1.msra.mxu0 0.0
    %257 = vmatprep.subr.mxu0 0.0
    %258 = vmatpush1.msra.mxu0 0.0
    %259 = vmatprep.subr.mxu0 0.0
    %260 = vmatpush1.msra.mxu0 0.0
    %261 = vmatprep.subr.mxu0 0.0
    %262 = vmatpush1.msra.mxu0 0.0
    %263 = vmatprep.subr.mxu0 0.0
    %264 = vmatpush1.msra.mxu0 0.0
    %265 = vmatprep.subr.mxu0 0.0
    %v266 = vand.u32 %v84, 4294901760
    %v267 = vsub.f32 %v84, %v266
    %v268 = vand.u32 %v267, 4294901760
    %v269 = vsub.f32 %v267, %v268
    %v270 = vand.u32 %v269, 4294901760
    %271 = vmatpush1.msra.mxu0 %v270
    %272 = vmatprep.subr.mxu0 0.0
    %v273 = vand.u32 %v83, 4294901760
    %v274 = vsub.f32 %v83, %v273
    %v275 = vand.u32 %v274, 4294901760
    %v276 = vsub.f32 %v274, %v275
    %v277 = vand.u32 %v276, 4294901760
    %278 = vmatpush1.msra.mxu0 %v277
    %279 = vmatprep.subr.mxu0 0.0
    %v280 = vand.u32 %v82, 4294901760
    %v281 = vsub.f32 %v82, %v280
    %v282 = vand.u32 %v281, 4294901760
    %v283 = vsub.f32 %v281, %v282
    %v284 = vand.u32 %v283, 4294901760
    %285 = vmatpush1.msra.mxu0 %v284
    %286 = vmatprep.subr.mxu0 0.0
    %v287 = vand.u32 %v81, 4294901760
    %v288 = vsub.f32 %v81, %v287
    %v289 = vand.u32 %v288, 4294901760
    %v290 = vsub.f32 %v288, %v289
    %v291 = vand.u32 %v290, 4294901760
    %292 = vmatpush1.msra.mxu0 %v291
    %293 = vmatprep.subr.mxu0 0.0
    %294 = vmatpush2.msra.mxu0 0.0
    %295 = vmatprep.subr.mxu0 0.0
    %296 = vmatpush2.msra.mxu0 0.0
    %297 = vmatprep.subr.mxu0 0.0
    %298 = vmatpush2.msra.mxu0 0.0
    %299 = vmatprep.subr.mxu0 0.0
    %300 = vmatpush2.msra.mxu0 0.0
    %301 = vmatprep.subr.mxu0 0.0
    %302 = vmatpush2.msra.mxu0 0.0
    %303 = vmatprep.subr.mxu0 0.0
    %304 = vmatpush2.msra.mxu0 0.0
    %305 = vmatprep.subr.mxu0 0.0
    %306 = vmatpush2.msra.mxu0 0.0
    %307 = vmatprep.subr.mxu0 0.0
    %308 = vmatpush2.msra.mxu0 0.0
    %309 = vmatprep.subr.mxu0 0.0
    %310 = vmatpush2.msra.mxu0 0.0
    %311 = vmatprep.subr.mxu0 0.0
    %312 = vmatpush2.msra.mxu0 0.0
    %313 = vmatprep.subr.mxu0 0.0
    %314 = vmatpush2.msra.mxu0 0.0
    %315 = vmatprep.subr.mxu0 0.0
    %316 = vmatpush2.msra.mxu0 0.0
    %317 = vmatprep.subr.mxu0 0.0
    %318 = vmatpush2.msra.mxu0 0.0
    %319 = vmatprep.subr.mxu0 0.0
    %320 = vmatpush2.msra.mxu0 0.0
    %321 = vmatprep.subr.mxu0 0.0
    %322 = vmatpush2.msra.mxu0 0.0
    %323 = vmatprep.subr.mxu0 0.0
    %324 = vmatpush2.msra.mxu0 0.0
    %325 = vmatprep.mubr.f32.mxu0 0.0
    %v326 = vand.u32 %v160, 4294901760
    %327 = vmatmul.mubr.f32.gmra.mxu0 %v326
    %v328 = vpop.f32.mrf.mxu0
    %v329 = vadd.f32 %v238, %v328
    %v330 = vpop.f32.mrf.mxu0
    %331 = vdwg.mxu0
    %332 = vmatprep.subr.mxu0 0.0
    %333 = vmatpush1.msra.mxu0 0.0
    %334 = vmatprep.subr.mxu0 0.0
    %335 = vmatpush1.msra.mxu0 0.0
    %336 = vmatprep.subr.mxu0 0.0
    %337 = vmatpush1.msra.mxu0 0.0
    %338 = vmatprep.subr.mxu0 0.0
    %339 = vmatpush1.msra.mxu0 0.0
    %340 = vmatprep.subr.mxu0 0.0
    %341 = vmatpush1.msra.mxu0 0.0
    %342 = vmatprep.subr.mxu0 0.0
    %343 = vmatpush1.msra.mxu0 0.0
    %344 = vmatprep.subr.mxu0 0.0
    %345 = vmatpush1.msra.mxu0 0.0
    %346 = vmatprep.subr.mxu0 0.0
    %347 = vmatpush1.msra.mxu0 0.0
    %348 = vmatprep.subr.mxu0 0.0
    %349 = vmatpush1.msra.mxu0 0.0
    %350 = vmatprep.subr.mxu0 0.0
    %351 = vmatpush1.msra.mxu0 0.0
    %352 = vmatprep.subr.mxu0 0.0
    %353 = vmatpush1.msra.mxu0 0.0
    %354 = vmatprep.subr.mxu0 0.0
    %355 = vmatpush1.msra.mxu0 0.0
    %356 = vmatprep.subr.mxu0 0.0
    %v357 = vand.u32 %v84, 4294901760
    %v358 = vsub.f32 %v84, %v357
    %359 = vmatpush1.msra.mxu0 %v358
    %360 = vmatprep.subr.mxu0 0.0
    %v361 = vand.u32 %v83, 4294901760
    %v362 = vsub.f32 %v83, %v361
    %363 = vmatpush1.msra.mxu0 %v362
    %364 = vmatprep.subr.mxu0 0.0
    %v365 = vand.u32 %v82, 4294901760
    %v366 = vsub.f32 %v82, %v365
    %367 = vmatpush1.msra.mxu0 %v366
    %368 = vmatprep.subr.mxu0 0.0
    %v369 = vand.u32 %v81, 4294901760
    %v370 = vsub.f32 %v81, %v369
    %371 = vmatpush1.msra.mxu0 %v370
    %372 = vmatprep.subr.mxu0 0.0
    %373 = vmatpush2.msra.mxu0 0.0
    %374 = vmatprep.subr.mxu0 0.0
    %375 = vmatpush2.msra.mxu0 0.0
    %376 = vmatprep.subr.mxu0 0.0
    %377 = vmatpush2.msra.mxu0 0.0
    %378 = vmatprep.subr.mxu0 0.0
    %379 = vmatpush2.msra.mxu0 0.0
    %380 = vmatprep.subr.mxu0 0.0
    %381 = vmatpush2.msra.mxu0 0.0
    %382 = vmatprep.subr.mxu0 0.0
    %383 = vmatpush2.msra.mxu0 0.0
    %384 = vmatprep.subr.mxu0 0.0
    %385 = vmatpush2.msra.mxu0 0.0
    %386 = vmatprep.subr.mxu0 0.0
    %387 = vmatpush2.msra.mxu0 0.0
    %388 = vmatprep.subr.mxu0 0.0
    %389 = vmatpush2.msra.mxu0 0.0
    %390 = vmatprep.subr.mxu0 0.0
    %391 = vmatpush2.msra.mxu0 0.0
    %392 = vmatprep.subr.mxu0 0.0
    %393 = vmatpush2.msra.mxu0 0.0
    %394 = vmatprep.subr.mxu0 0.0
    %395 = vmatpush2.msra.mxu0 0.0
    %396 = vmatprep.subr.mxu0 0.0
    %397 = vmatpush2.msra.mxu0 0.0
    %398 = vmatprep.subr.mxu0 0.0
    %399 = vmatpush2.msra.mxu0 0.0
    %400 = vmatprep.subr.mxu0 0.0
    %401 = vmatpush2.msra.mxu0 0.0
    %402 = vmatprep.subr.mxu0 0.0
    %403 = vmatpush2.msra.mxu0 0.0
    %404 = vmatprep.mubr.f32.mxu0 0.0
    %v405 = vand.u32 %v160, 4294901760
    %v406 = vsub.f32 %v160, %v405
    %407 = vmatmul.mubr.f32.gmra.mxu0 %v406
    %v408 = vpop.f32.mrf.mxu0
    %v409 = vadd.f32 %v329, %v408
    %v410 = vpop.f32.mrf.mxu0
    %411 = vdwg.mxu0
    %412 = vmatprep.subr.mxu0 0.0
    %413 = vmatpush1.msra.mxu0 0.0
    %414 = vmatprep.subr.mxu0 0.0
    %415 = vmatpush1.msra.mxu0 0.0
    %416 = vmatprep.subr.mxu0 0.0
    %417 = vmatpush1.msra.mxu0 0.0
    %418 = vmatprep.subr.mxu0 0.0
    %419 = vmatpush1.msra.mxu0 0.0
    %420 = vmatprep.subr.mxu0 0.0
    %421 = vmatpush1.msra.mxu0 0.0
    %422 = vmatprep.subr.mxu0 0.0
    %423 = vmatpush1.msra.mxu0 0.0
    %424 = vmatprep.subr.mxu0 0.0
    %425 = vmatpush1.msra.mxu0 0.0
    %426 = vmatprep.subr.mxu0 0.0
    %427 = vmatpush1.msra.mxu0 0.0
    %428 = vmatprep.subr.mxu0 0.0
    %429 = vmatpush1.msra.mxu0 0.0
    %430 = vmatprep.subr.mxu0 0.0
    %431 = vmatpush1.msra.mxu0 0.0
    %432 = vmatprep.subr.mxu0 0.0
    %433 = vmatpush1.msra.mxu0 0.0
    %434 = vmatprep.subr.mxu0 0.0
    %435 = vmatpush1.msra.mxu0 0.0
    %436 = vmatprep.subr.mxu0 0.0
    %v437 = vand.u32 %v84, 4294901760
    %438 = vmatpush1.msra.mxu0 %v437
    %439 = vmatprep.subr.mxu0 0.0
    %v440 = vand.u32 %v83, 4294901760
    %441 = vmatpush1.msra.mxu0 %v440
    %442 = vmatprep.subr.mxu0 0.0
    %v443 = vand.u32 %v82, 4294901760
    %444 = vmatpush1.msra.mxu0 %v443
    %445 = vmatprep.subr.mxu0 0.0
    %v446 = vand.u32 %v81, 4294901760
    %447 = vmatpush1.msra.mxu0 %v446
    %448 = vmatprep.subr.mxu0 0.0
    %449 = vmatpush2.msra.mxu0 0.0
    %450 = vmatprep.subr.mxu0 0.0
    %451 = vmatpush2.msra.mxu0 0.0
    %452 = vmatprep.subr.mxu0 0.0
    %453 = vmatpush2.msra.mxu0 0.0
    %454 = vmatprep.subr.mxu0 0.0
    %455 = vmatpush2.msra.mxu0 0.0
    %456 = vmatprep.subr.mxu0 0.0
    %457 = vmatpush2.msra.mxu0 0.0
    %458 = vmatprep.subr.mxu0 0.0
    %459 = vmatpush2.msra.mxu0 0.0
    %460 = vmatprep.subr.mxu0 0.0
    %461 = vmatpush2.msra.mxu0 0.0
    %462 = vmatprep.subr.mxu0 0.0
    %463 = vmatpush2.msra.mxu0 0.0
    %464 = vmatprep.subr.mxu0 0.0
    %465 = vmatpush2.msra.mxu0 0.0
    %466 = vmatprep.subr.mxu0 0.0
    %467 = vmatpush2.msra.mxu0 0.0
    %468 = vmatprep.subr.mxu0 0.0
    %469 = vmatpush2.msra.mxu0 0.0
    %470 = vmatprep.subr.mxu0 0.0
    %471 = vmatpush2.msra.mxu0 0.0
    %472 = vmatprep.subr.mxu0 0.0
    %473 = vmatpush2.msra.mxu0 0.0
    %474 = vmatprep.subr.mxu0 0.0
    %475 = vmatpush2.msra.mxu0 0.0
    %476 = vmatprep.subr.mxu0 0.0
    %477 = vmatpush2.msra.mxu0 0.0
    %478 = vmatprep.subr.mxu0 0.0
    %479 = vmatpush2.msra.mxu0 0.0
    %480 = vmatprep.mubr.f32.mxu0 0.0
    %v481 = vand.u32 %v160, 4294901760
    %v482 = vsub.f32 %v160, %v481
    %v483 = vand.u32 %v482, 4294901760
    %484 = vmatmul.mubr.f32.gmra.mxu0 %v483
    %v485 = vpop.f32.mrf.mxu0
    %v486 = vadd.f32 %v409, %v485
    %v487 = vpop.f32.mrf.mxu0
    %488 = vdwg.mxu0
    %489 = vmatprep.subr.mxu0 0.0
    %490 = vmatpush1.msra.mxu0 0.0
    %491 = vmatprep.subr.mxu0 0.0
    %492 = vmatpush1.msra.mxu0 0.0
    %493 = vmatprep.subr.mxu0 0.0
    %494 = vmatpush1.msra.mxu0 0.0
    %495 = vmatprep.subr.mxu0 0.0
    %496 = vmatpush1.msra.mxu0 0.0
    %497 = vmatprep.subr.mxu0 0.0
    %498 = vmatpush1.msra.mxu0 0.0
    %499 = vmatprep.subr.mxu0 0.0
    %500 = vmatpush1.msra.mxu0 0.0
    %501 = vmatprep.subr.mxu0 0.0
    %502 = vmatpush1.msra.mxu0 0.0
    %503 = vmatprep.subr.mxu0 0.0
    %504 = vmatpush1.msra.mxu0 0.0
    %505 = vmatprep.subr.mxu0 0.0
    %506 = vmatpush1.msra.mxu0 0.0
    %507 = vmatprep.subr.mxu0 0.0
    %508 = vmatpush1.msra.mxu0 0.0
    %509 = vmatprep.subr.mxu0 0.0
    %510 = vmatpush1.msra.mxu0 0.0
    %511 = vmatprep.subr.mxu0 0.0
    %512 = vmatpush1.msra.mxu0 0.0
    %513 = vmatprep.subr.mxu0 0.0
    %v514 = vand.u32 %v84, 4294901760
    %v515 = vsub.f32 %v84, %v514
    %v516 = vand.u32 %v515, 4294901760
    %517 = vmatpush1.msra.mxu0 %v516
    %518 = vmatprep.subr.mxu0 0.0
    %v519 = vand.u32 %v83, 4294901760
    %v520 = vsub.f32 %v83, %v519
    %v521 = vand.u32 %v520, 4294901760
    %522 = vmatpush1.msra.mxu0 %v521
    %523 = vmatprep.subr.mxu0 0.0
    %v524 = vand.u32 %v82, 4294901760
    %v525 = vsub.f32 %v82, %v524
    %v526 = vand.u32 %v525, 4294901760
    %527 = vmatpush1.msra.mxu0 %v526
    %528 = vmatprep.subr.mxu0 0.0
    %v529 = vand.u32 %v81, 4294901760
    %v530 = vsub.f32 %v81, %v529
    %v531 = vand.u32 %v530, 4294901760
    %532 = vmatpush1.msra.mxu0 %v531
    %533 = vmatprep.subr.mxu0 0.0
    %534 = vmatpush2.msra.mxu0 0.0
    %535 = vmatprep.subr.mxu0 0.0
    %536 = vmatpush2.msra.mxu0 0.0
    %537 = vmatprep.subr.mxu0 0.0
    %538 = vmatpush2.msra.mxu0 0.0
    %539 = vmatprep.subr.mxu0 0.0
    %540 = vmatpush2.msra.mxu0 0.0
    %541 = vmatprep.subr.mxu0 0.0
    %542 = vmatpush2.msra.mxu0 0.0
    %543 = vmatprep.subr.mxu0 0.0
    %544 = vmatpush2.msra.mxu0 0.0
    %545 = vmatprep.subr.mxu0 0.0
    %546 = vmatpush2.msra.mxu0 0.0
    %547 = vmatprep.subr.mxu0 0.0
    %548 = vmatpush2.msra.mxu0 0.0
    %549 = vmatprep.subr.mxu0 0.0
    %550 = vmatpush2.msra.mxu0 0.0
    %551 = vmatprep.subr.mxu0 0.0
    %552 = vmatpush2.msra.mxu0 0.0
    %553 = vmatprep.subr.mxu0 0.0
    %554 = vmatpush2.msra.mxu0 0.0
    %555 = vmatprep.subr.mxu0 0.0
    %556 = vmatpush2.msra.mxu0 0.0
    %557 = vmatprep.subr.mxu0 0.0
    %558 = vmatpush2.msra.mxu0 0.0
    %559 = vmatprep.subr.mxu0 0.0
    %560 = vmatpush2.msra.mxu0 0.0
    %561 = vmatprep.subr.mxu0 0.0
    %562 = vmatpush2.msra.mxu0 0.0
    %563 = vmatprep.subr.mxu0 0.0
    %564 = vmatpush2.msra.mxu0 0.0
    %565 = vmatprep.mubr.f32.mxu0 0.0
    %v566 = vand.u32 %v160, 4294901760
    %567 = vmatmul.mubr.f32.gmra.mxu0 %v566
    %v568 = vpop.f32.mrf.mxu0
    %v569 = vadd.f32 %v486, %v568
    %v570 = vpop.f32.mrf.mxu0
    %571 = vdwg.mxu0
    %572 = vmatprep.subr.mxu0 0.0
    %573 = vmatpush1.msra.mxu0 0.0
    %574 = vmatprep.subr.mxu0 0.0
    %575 = vmatpush1.msra.mxu0 0.0
    %576 = vmatprep.subr.mxu0 0.0
    %577 = vmatpush1.msra.mxu0 0.0
    %578 = vmatprep.subr.mxu0 0.0
    %579 = vmatpush1.msra.mxu0 0.0
    %580 = vmatprep.subr.mxu0 0.0
    %581 = vmatpush1.msra.mxu0 0.0
    %582 = vmatprep.subr.mxu0 0.0
    %583 = vmatpush1.msra.mxu0 0.0
    %584 = vmatprep.subr.mxu0 0.0
    %585 = vmatpush1.msra.mxu0 0.0
    %586 = vmatprep.subr.mxu0 0.0
    %587 = vmatpush1.msra.mxu0 0.0
    %588 = vmatprep.subr.mxu0 0.0
    %589 = vmatpush1.msra.mxu0 0.0
    %590 = vmatprep.subr.mxu0 0.0
    %591 = vmatpush1.msra.mxu0 0.0
    %592 = vmatprep.subr.mxu0 0.0
    %593 = vmatpush1.msra.mxu0 0.0
    %594 = vmatprep.subr.mxu0 0.0
    %595 = vmatpush1.msra.mxu0 0.0
    %596 = vmatprep.subr.mxu0 0.0
    %v597 = vand.u32 %v84, 4294901760
    %598 = vmatpush1.msra.mxu0 %v597
    %599 = vmatprep.subr.mxu0 0.0
    %v600 = vand.u32 %v83, 4294901760
    %601 = vmatpush1.msra.mxu0 %v600
    %602 = vmatprep.subr.mxu0 0.0
    %v603 = vand.u32 %v82, 4294901760
    %604 = vmatpush1.msra.mxu0 %v603
    %605 = vmatprep.subr.mxu0 0.0
    %v606 = vand.u32 %v81, 4294901760
    %607 = vmatpush1.msra.mxu0 %v606
    %608 = vmatprep.subr.mxu0 0.0
    %609 = vmatpush2.msra.mxu0 0.0
    %610 = vmatprep.subr.mxu0 0.0
    %611 = vmatpush2.msra.mxu0 0.0
    %612 = vmatprep.subr.mxu0 0.0
    %613 = vmatpush2.msra.mxu0 0.0
    %614 = vmatprep.subr.mxu0 0.0
    %615 = vmatpush2.msra.mxu0 0.0
    %616 = vmatprep.subr.mxu0 0.0
    %617 = vmatpush2.msra.mxu0 0.0
    %618 = vmatprep.subr.mxu0 0.0
    %619 = vmatpush2.msra.mxu0 0.0
    %620 = vmatprep.subr.mxu0 0.0
    %621 = vmatpush2.msra.mxu0 0.0
    %622 = vmatprep.subr.mxu0 0.0
    %623 = vmatpush2.msra.mxu0 0.0
    %624 = vmatprep.subr.mxu0 0.0
    %625 = vmatpush2.msra.mxu0 0.0
    %626 = vmatprep.subr.mxu0 0.0
    %627 = vmatpush2.msra.mxu0 0.0
    %628 = vmatprep.subr.mxu0 0.0
    %629 = vmatpush2.msra.mxu0 0.0
    %630 = vmatprep.subr.mxu0 0.0
    %631 = vmatpush2.msra.mxu0 0.0
    %632 = vmatprep.subr.mxu0 0.0
    %633 = vmatpush2.msra.mxu0 0.0
    %634 = vmatprep.subr.mxu0 0.0
    %635 = vmatpush2.msra.mxu0 0.0
    %636 = vmatprep.subr.mxu0 0.0
    %637 = vmatpush2.msra.mxu0 0.0
    %638 = vmatprep.subr.mxu0 0.0
    %639 = vmatpush2.msra.mxu0 0.0
    %640 = vmatprep.mubr.f32.mxu0 0.0
    %v641 = vand.u32 %v160, 4294901760
    %642 = vmatmul.mubr.f32.gmra.mxu0 %v641
    %v643 = vpop.f32.mrf.mxu0
    %v644 = vadd.f32 %v569, %v643
    %v645 = vpop.f32.mrf.mxu0
    %646 = vdwg.mxu0
    %v647 = vmax.f32 %v644, 0.0
    %v649 = vlaneseq
    %v650 = vshrl.u32 %v649, 7
    %v651 = vsub.s32 0, %v650
    %v652 = vrot.slane %v118, %v651
    %v653 = vlaneseq
    %v654 = vshrl.u32 %v653, 7
    %v655 = vsub.s32 1, %v654
    %v656 = vrot.slane %v118, %v655
    %v659 = vand.u32 %v117, 4294901760
    %660 = vmatprep.subr.mxu0 %v659
    %v661 = vand.u32 %v116, 4294901760
    %662 = vmatpush1.msra.mxu0 %v661
    %v663 = vand.u32 %v115, 4294901760
    %664 = vmatprep.subr.mxu0 %v663
    %v665 = vand.u32 %v114, 4294901760
    %666 = vmatpush1.msra.mxu0 %v665
    %v667 = vand.u32 %v113, 4294901760
    %668 = vmatprep.subr.mxu0 %v667
    %v669 = vand.u32 %v112, 4294901760
    %670 = vmatpush1.msra.mxu0 %v669
    %v671 = vand.u32 %v111, 4294901760
    %672 = vmatprep.subr.mxu0 %v671
    %v673 = vand.u32 %v110, 4294901760
    %674 = vmatpush1.msra.mxu0 %v673
    %v675 = vand.u32 %v109, 4294901760
    %676 = vmatprep.subr.mxu0 %v675
    %v677 = vand.u32 %v108, 4294901760
    %678 = vmatpush1.msra.mxu0 %v677
    %v679 = vand.u32 %v107, 4294901760
    %680 = vmatprep.subr.mxu0 %v679
    %v681 = vand.u32 %v106, 4294901760
    %682 = vmatpush1.msra.mxu0 %v681
    %v683 = vand.u32 %v105, 4294901760
    %684 = vmatprep.subr.mxu0 %v683
    %v685 = vand.u32 %v104, 4294901760
    %686 = vmatpush1.msra.mxu0 %v685
    %v687 = vand.u32 %v103, 4294901760
    %688 = vmatprep.subr.mxu0 %v687
    %v689 = vand.u32 %v102, 4294901760
    %690 = vmatpush1.msra.mxu0 %v689
    %v691 = vand.u32 %v101, 4294901760
    %692 = vmatprep.subr.mxu0 %v691
    %v693 = vand.u32 %v100, 4294901760
    %694 = vmatpush1.msra.mxu0 %v693
    %v695 = vand.u32 %v99, 4294901760
    %696 = vmatprep.subr.mxu0 %v695
    %v697 = vand.u32 %v98, 4294901760
    %698 = vmatpush1.msra.mxu0 %v697
    %v699 = vand.u32 %v97, 4294901760
    %700 = vmatprep.subr.mxu0 %v699
    %v701 = vand.u32 %v96, 4294901760
    %702 = vmatpush1.msra.mxu0 %v701
    %v703 = vand.u32 %v95, 4294901760
    %704 = vmatprep.subr.mxu0 %v703
    %v705 = vand.u32 %v94, 4294901760
    %706 = vmatpush1.msra.mxu0 %v705
    %v707 = vand.u32 %v93, 4294901760
    %708 = vmatprep.subr.mxu0 %v707
    %v709 = vand.u32 %v92, 4294901760
    %710 = vmatpush1.msra.mxu0 %v709
    %v711 = vand.u32 %v91, 4294901760
    %712 = vmatprep.subr.mxu0 %v711
    %v713 = vand.u32 %v90, 4294901760
    %714 = vmatpush1.msra.mxu0 %v713
    %v715 = vand.u32 %v89, 4294901760
    %716 = vmatprep.subr.mxu0 %v715
    %v717 = vand.u32 %v88, 4294901760
    %718 = vmatpush1.msra.mxu0 %v717
    %v719 = vand.u32 %v87, 4294901760
    %720 = vmatprep.subr.mxu0 %v719
    %v721 = vand.u32 %v86, 4294901760
    %722 = vmatpush1.msra.mxu0 %v721
    %723 = vmatprep.subr.mxu0 0.0
    %724 = vmatpush2.msra.mxu0 0.0
    %725 = vmatprep.subr.mxu0 0.0
    %726 = vmatpush2.msra.mxu0 0.0
    %727 = vmatprep.subr.mxu0 0.0
    %728 = vmatpush2.msra.mxu0 0.0
    %729 = vmatprep.subr.mxu0 0.0
    %730 = vmatpush2.msra.mxu0 0.0
    %731 = vmatprep.subr.mxu0 0.0
    %732 = vmatpush2.msra.mxu0 0.0
    %733 = vmatprep.subr.mxu0 0.0
    %734 = vmatpush2.msra.mxu0 0.0
    %735 = vmatprep.subr.mxu0 0.0
    %736 = vmatpush2.msra.mxu0 0.0
    %737 = vmatprep.subr.mxu0 0.0
    %738 = vmatpush2.msra.mxu0 0.0
    %739 = vmatprep.subr.mxu0 0.0
    %740 = vmatpush2.msra.mxu0 0.0
    %741 = vmatprep.subr.mxu0 0.0
    %742 = vmatpush2.msra.mxu0 0.0
    %743 = vmatprep.subr.mxu0 0.0
    %744 = vmatpush2.msra.mxu0 0.0
    %745 = vmatprep.subr.mxu0 0.0
    %746 = vmatpush2.msra.mxu0 0.0
    %747 = vmatprep.subr.mxu0 0.0
    %748 = vmatpush2.msra.mxu0 0.0
    %749 = vmatprep.subr.mxu0 0.0
    %750 = vmatpush2.msra.mxu0 0.0
    %751 = vmatprep.subr.mxu0 0.0
    %752 = vmatpush2.msra.mxu0 0.0
    %753 = vmatprep.subr.mxu0 0.0
    %754 = vmatpush2.msra.mxu0 0.0
    %755 = vmatprep.mubr.f32.mxu0 0.0
    %v756 = vand.u32 %v647, 4294901760
    %v757 = vsub.f32 %v647, %v756
    %v758 = vand.u32 %v757, 4294901760
    %v759 = vsub.f32 %v757, %v758
    %v760 = vand.u32 %v759, 4294901760
    %761 = vmatmul.mubr.f32.gmra.mxu0 %v760
    %v762 = vpop.f32.mrf.mxu0
    %v763 = vadd.f32 %v652, %v762
    %v764 = vpop.f32.mrf.mxu0
    %v765 = vadd.f32 %v656, %v764
    %766 = vdwg.mxu0
    %v767 = vand.u32 %v117, 4294901760
    %v768 = vsub.f32 %v117, %v767
    %v769 = vand.u32 %v768, 4294901760
    %v770 = vsub.f32 %v768, %v769
    %v771 = vand.u32 %v770, 4294901760
    %772 = vmatprep.subr.mxu0 %v771
    %v773 = vand.u32 %v116, 4294901760
    %v774 = vsub.f32 %v116, %v773
    %v775 = vand.u32 %v774, 4294901760
    %v776 = vsub.f32 %v774, %v775
    %v777 = vand.u32 %v776, 4294901760
    %778 = vmatpush1.msra.mxu0 %v777
    %v779 = vand.u32 %v115, 4294901760
    %v780 = vsub.f32 %v115, %v779
    %v781 = vand.u32 %v780, 4294901760
    %v782 = vsub.f32 %v780, %v781
    %v783 = vand.u32 %v782, 4294901760
    %784 = vmatprep.subr.mxu0 %v783
    %v785 = vand.u32 %v114, 4294901760
    %v786 = vsub.f32 %v114, %v785
    %v787 = vand.u32 %v786, 4294901760
    %v788 = vsub.f32 %v786, %v787
    %v789 = vand.u32 %v788, 4294901760
    %790 = vmatpush1.msra.mxu0 %v789
    %v791 = vand.u32 %v113, 4294901760
    %v792 = vsub.f32 %v113, %v791
    %v793 = vand.u32 %v792, 4294901760
    %v794 = vsub.f32 %v792, %v793
    %v795 = vand.u32 %v794, 4294901760
    %796 = vmatprep.subr.mxu0 %v795
    %v797 = vand.u32 %v112, 4294901760
    %v798 = vsub.f32 %v112, %v797
    %v799 = vand.u32 %v798, 4294901760
    %v800 = vsub.f32 %v798, %v799
    %v801 = vand.u32 %v800, 4294901760
    %802 = vmatpush1.msra.mxu0 %v801
    %v803 = vand.u32 %v111, 4294901760
    %v804 = vsub.f32 %v111, %v803
    %v805 = vand.u32 %v804, 4294901760
    %v806 = vsub.f32 %v804, %v805
    %v807 = vand.u32 %v806, 4294901760
    %808 = vmatprep.subr.mxu0 %v807
    %v809 = vand.u32 %v110, 4294901760
    %v810 = vsub.f32 %v110, %v809
    %v811 = vand.u32 %v810, 4294901760
    %v812 = vsub.f32 %v810, %v811
    %v813 = vand.u32 %v812, 4294901760
    %814 = vmatpush1.msra.mxu0 %v813
    %v815 = vand.u32 %v109, 4294901760
    %v816 = vsub.f32 %v109, %v815
    %v817 = vand.u32 %v816, 4294901760
    %v818 = vsub.f32 %v816, %v817
    %v819 = vand.u32 %v818, 4294901760
    %820 = vmatprep.subr.mxu0 %v819
    %v821 = vand.u32 %v108, 4294901760
    %v822 = vsub.f32 %v108, %v821
    %v823 = vand.u32 %v822, 4294901760
    %v824 = vsub.f32 %v822, %v823
    %v825 = vand.u32 %v824, 4294901760
    %826 = vmatpush1.msra.mxu0 %v825
    %v827 = vand.u32 %v107, 4294901760
    %v828 = vsub.f32 %v107, %v827
    %v829 = vand.u32 %v828, 4294901760
    %v830 = vsub.f32 %v828, %v829
    %v831 = vand.u32 %v830, 4294901760
    %832 = vmatprep.subr.mxu0 %v831
    %v833 = vand.u32 %v106, 4294901760
    %v834 = vsub.f32 %v106, %v833
    %v835 = vand.u32 %v834, 4294901760
    %v836 = vsub.f32 %v834, %v835
    %v837 = vand.u32 %v836, 4294901760
    %838 = vmatpush1.msra.mxu0 %v837
    %v839 = vand.u32 %v105, 4294901760
    %v840 = vsub.f32 %v105, %v839
    %v841 = vand.u32 %v840, 4294901760
    %v842 = vsub.f32 %v840, %v841
    %v843 = vand.u32 %v842, 4294901760
    %844 = vmatprep.subr.mxu0 %v843
    %v845 = vand.u32 %v104, 4294901760
    %v846 = vsub.f32 %v104, %v845
    %v847 = vand.u32 %v846, 4294901760
    %v848 = vsub.f32 %v846, %v847
    %v849 = vand.u32 %v848, 4294901760
    %850 = vmatpush1.msra.mxu0 %v849
    %v851 = vand.u32 %v103, 4294901760
    %v852 = vsub.f32 %v103, %v851
    %v853 = vand.u32 %v852, 4294901760
    %v854 = vsub.f32 %v852, %v853
    %v855 = vand.u32 %v854, 4294901760
    %856 = vmatprep.subr.mxu0 %v855
    %v857 = vand.u32 %v102, 4294901760
    %v858 = vsub.f32 %v102, %v857
    %v859 = vand.u32 %v858, 4294901760
    %v860 = vsub.f32 %v858, %v859
    %v861 = vand.u32 %v860, 4294901760
    %862 = vmatpush1.msra.mxu0 %v861
    %v863 = vand.u32 %v101, 4294901760
    %v864 = vsub.f32 %v101, %v863
    %v865 = vand.u32 %v864, 4294901760
    %v866 = vsub.f32 %v864, %v865
    %v867 = vand.u32 %v866, 4294901760
    %868 = vmatprep.subr.mxu0 %v867
    %v869 = vand.u32 %v100, 4294901760
    %v870 = vsub.f32 %v100, %v869
    %v871 = vand.u32 %v870, 4294901760
    %v872 = vsub.f32 %v870, %v871
    %v873 = vand.u32 %v872, 4294901760
    %874 = vmatpush1.msra.mxu0 %v873
    %v875 = vand.u32 %v99, 4294901760
    %v876 = vsub.f32 %v99, %v875
    %v877 = vand.u32 %v876, 4294901760
    %v878 = vsub.f32 %v876, %v877
    %v879 = vand.u32 %v878, 4294901760
    %880 = vmatprep.subr.mxu0 %v879
    %v881 = vand.u32 %v98, 4294901760
    %v882 = vsub.f32 %v98, %v881
    %v883 = vand.u32 %v882, 4294901760
    %v884 = vsub.f32 %v882, %v883
    %v885 = vand.u32 %v884, 4294901760
    %886 = vmatpush1.msra.mxu0 %v885
    %v887 = vand.u32 %v97, 4294901760
    %v888 = vsub.f32 %v97, %v887
    %v889 = vand.u32 %v888, 4294901760
    %v890 = vsub.f32 %v888, %v889
    %v891 = vand.u32 %v890, 4294901760
    %892 = vmatprep.subr.mxu0 %v891
    %v893 = vand.u32 %v96, 4294901760
    %v894 = vsub.f32 %v96, %v893
    %v895 = vand.u32 %v894, 4294901760
    %v896 = vsub.f32 %v894, %v895
    %v897 = vand.u32 %v896, 4294901760
    %898 = vmatpush1.msra.mxu0 %v897
    %v899 = vand.u32 %v95, 4294901760
    %v900 = vsub.f32 %v95, %v899
    %v901 = vand.u32 %v900, 4294901760
    %v902 = vsub.f32 %v900, %v901
    %v903 = vand.u32 %v902, 4294901760
    %904 = vmatprep.subr.mxu0 %v903
    %v905 = vand.u32 %v94, 4294901760
    %v906 = vsub.f32 %v94, %v905
    %v907 = vand.u32 %v906, 4294901760
    %v908 = vsub.f32 %v906, %v907
    %v909 = vand.u32 %v908, 4294901760
    %910 = vmatpush1.msra.mxu0 %v909
    %v911 = vand.u32 %v93, 4294901760
    %v912 = vsub.f32 %v93, %v911
    %v913 = vand.u32 %v912, 4294901760
    %v914 = vsub.f32 %v912, %v913
    %v915 = vand.u32 %v914, 4294901760
    %916 = vmatprep.subr.mxu0 %v915
    %v917 = vand.u32 %v92, 4294901760
    %v918 = vsub.f32 %v92, %v917
    %v919 = vand.u32 %v918, 4294901760
    %v920 = vsub.f32 %v918, %v919
    %v921 = vand.u32 %v920, 4294901760
    %922 = vmatpush1.msra.mxu0 %v921
    %v923 = vand.u32 %v91, 4294901760
    %v924 = vsub.f32 %v91, %v923
    %v925 = vand.u32 %v924, 4294901760
    %v926 = vsub.f32 %v924, %v925
    %v927 = vand.u32 %v926, 4294901760
    %928 = vmatprep.subr.mxu0 %v927
    %v929 = vand.u32 %v90, 4294901760
    %v930 = vsub.f32 %v90, %v929
    %v931 = vand.u32 %v930, 4294901760
    %v932 = vsub.f32 %v930, %v931
    %v933 = vand.u32 %v932, 4294901760
    %934 = vmatpush1.msra.mxu0 %v933
    %v935 = vand.u32 %v89, 4294901760
    %v936 = vsub.f32 %v89, %v935
    %v937 = vand.u32 %v936, 4294901760
    %v938 = vsub.f32 %v936, %v937
    %v939 = vand.u32 %v938, 4294901760
    %940 = vmatprep.subr.mxu0 %v939
    %v941 = vand.u32 %v88, 4294901760
    %v942 = vsub.f32 %v88, %v941
    %v943 = vand.u32 %v942, 4294901760
    %v944 = vsub.f32 %v942, %v943
    %v945 = vand.u32 %v944, 4294901760
    %946 = vmatpush1.msra.mxu0 %v945
    %v947 = vand.u32 %v87, 4294901760
    %v948 = vsub.f32 %v87, %v947
    %v949 = vand.u32 %v948, 4294901760
    %v950 = vsub.f32 %v948, %v949
    %v951 = vand.u32 %v950, 4294901760
    %952 = vmatprep.subr.mxu0 %v951
    %v953 = vand.u32 %v86, 4294901760
    %v954 = vsub.f32 %v86, %v953
    %v955 = vand.u32 %v954, 4294901760
    %v956 = vsub.f32 %v954, %v955
    %v957 = vand.u32 %v956, 4294901760
    %958 = vmatpush1.msra.mxu0 %v957
    %959 = vmatprep.subr.mxu0 0.0
    %960 = vmatpush2.msra.mxu0 0.0
    %961 = vmatprep.subr.mxu0 0.0
    %962 = vmatpush2.msra.mxu0 0.0
    %963 = vmatprep.subr.mxu0 0.0
    %964 = vmatpush2.msra.mxu0 0.0
    %965 = vmatprep.subr.mxu0 0.0
    %966 = vmatpush2.msra.mxu0 0.0
    %967 = vmatprep.subr.mxu0 0.0
    %968 = vmatpush2.msra.mxu0 0.0
    %969 = vmatprep.subr.mxu0 0.0
    %970 = vmatpush2.msra.mxu0 0.0
    %971 = vmatprep.subr.mxu0 0.0
    %972 = vmatpush2.msra.mxu0 0.0
    %973 = vmatprep.subr.mxu0 0.0
    %974 = vmatpush2.msra.mxu0 0.0
    %975 = vmatprep.subr.mxu0 0.0
    %976 = vmatpush2.msra.mxu0 0.0
    %977 = vmatprep.subr.mxu0 0.0
    %978 = vmatpush2.msra.mxu0 0.0
    %979 = vmatprep.subr.mxu0 0.0
    %980 = vmatpush2.msra.mxu0 0.0
    %981 = vmatprep.subr.mxu0 0.0
    %982 = vmatpush2.msra.mxu0 0.0
    %983 = vmatprep.subr.mxu0 0.0
    %984 = vmatpush2.msra.mxu0 0.0
    %985 = vmatprep.subr.mxu0 0.0
    %986 = vmatpush2.msra.mxu0 0.0
    %987 = vmatprep.subr.mxu0 0.0
    %988 = vmatpush2.msra.mxu0 0.0
    %989 = vmatprep.subr.mxu0 0.0
    %990 = vmatpush2.msra.mxu0 0.0
    %991 = vmatprep.mubr.f32.mxu0 0.0
    %v992 = vand.u32 %v647, 4294901760
    %993 = vmatmul.mubr.f32.gmra.mxu0 %v992
    %v994 = vpop.f32.mrf.mxu0
    %v995 = vadd.f32 %v763, %v994
    %v996 = vpop.f32.mrf.mxu0
    %v997 = vadd.f32 %v765, %v996
    %998 = vdwg.mxu0
    %v999 = vand.u32 %v117, 4294901760
    %v1000 = vsub.f32 %v117, %v999
    %1001 = vmatprep.subr.mxu0 %v1000
    %v1002 = vand.u32 %v116, 4294901760
    %v1003 = vsub.f32 %v116, %v1002
    %1004 = vmatpush1.msra.mxu0 %v1003
    %v1005 = vand.u32 %v115, 4294901760
    %v1006 = vsub.f32 %v115, %v1005
    %1007 = vmatprep.subr.mxu0 %v1006
    %v1008 = vand.u32 %v114, 4294901760
    %v1009 = vsub.f32 %v114, %v1008
    %1010 = vmatpush1.msra.mxu0 %v1009
    %v1011 = vand.u32 %v113, 4294901760
    %v1012 = vsub.f32 %v113, %v1011
    %1013 = vmatprep.subr.mxu0 %v1012
    %v1014 = vand.u32 %v112, 4294901760
    %v1015 = vsub.f32 %v112, %v1014
    %1016 = vmatpush1.msra.mxu0 %v1015
    %v1017 = vand.u32 %v111, 4294901760
    %v1018 = vsub.f32 %v111, %v1017
    %1019 = vmatprep.subr.mxu0 %v1018
    %v1020 = vand.u32 %v110, 4294901760
    %v1021 = vsub.f32 %v110, %v1020
    %1022 = vmatpush1.msra.mxu0 %v1021
    %v1023 = vand.u32 %v109, 4294901760
    %v1024 = vsub.f32 %v109, %v1023
    %1025 = vmatprep.subr.mxu0 %v1024
    %v1026 = vand.u32 %v108, 4294901760
    %v1027 = vsub.f32 %v108, %v1026
    %1028 = vmatpush1.msra.mxu0 %v1027
    %v1029 = vand.u32 %v107, 4294901760
    %v1030 = vsub.f32 %v107, %v1029
    %1031 = vmatprep.subr.mxu0 %v1030
    %v1032 = vand.u32 %v106, 4294901760
    %v1033 = vsub.f32 %v106, %v1032
    %1034 = vmatpush1.msra.mxu0 %v1033
    %v1035 = vand.u32 %v105, 4294901760
    %v1036 = vsub.f32 %v105, %v1035
    %1037 = vmatprep.subr.mxu0 %v1036
    %v1038 = vand.u32 %v104, 4294901760
    %v1039 = vsub.f32 %v104, %v1038
    %1040 = vmatpush1.msra.mxu0 %v1039
    %v1041 = vand.u32 %v103, 4294901760
    %v1042 = vsub.f32 %v103, %v1041
    %1043 = vmatprep.subr.mxu0 %v1042
    %v1044 = vand.u32 %v102, 4294901760
    %v1045 = vsub.f32 %v102, %v1044
    %1046 = vmatpush1.msra.mxu0 %v1045
    %v1047 = vand.u32 %v101, 4294901760
    %v1048 = vsub.f32 %v101, %v1047
    %1049 = vmatprep.subr.mxu0 %v1048
    %v1050 = vand.u32 %v100, 4294901760
    %v1051 = vsub.f32 %v100, %v1050
    %1052 = vmatpush1.msra.mxu0 %v1051
    %v1053 = vand.u32 %v99, 4294901760
    %v1054 = vsub.f32 %v99, %v1053
    %1055 = vmatprep.subr.mxu0 %v1054
    %v1056 = vand.u32 %v98, 4294901760
    %v1057 = vsub.f32 %v98, %v1056
    %1058 = vmatpush1.msra.mxu0 %v1057
    %v1059 = vand.u32 %v97, 4294901760
    %v1060 = vsub.f32 %v97, %v1059
    %1061 = vmatprep.subr.mxu0 %v1060
    %v1062 = vand.u32 %v96, 4294901760
    %v1063 = vsub.f32 %v96, %v1062
    %1064 = vmatpush1.msra.mxu0 %v1063
    %v1065 = vand.u32 %v95, 4294901760
    %v1066 = vsub.f32 %v95, %v1065
    %1067 = vmatprep.subr.mxu0 %v1066
    %v1068 = vand.u32 %v94, 4294901760
    %v1069 = vsub.f32 %v94, %v1068
    %1070 = vmatpush1.msra.mxu0 %v1069
    %v1071 = vand.u32 %v93, 4294901760
    %v1072 = vsub.f32 %v93, %v1071
    %1073 = vmatprep.subr.mxu0 %v1072
    %v1074 = vand.u32 %v92, 4294901760
    %v1075 = vsub.f32 %v92, %v1074
    %1076 = vmatpush1.msra.mxu0 %v1075
    %v1077 = vand.u32 %v91, 4294901760
    %v1078 = vsub.f32 %v91, %v1077
    %1079 = vmatprep.subr.mxu0 %v1078
    %v1080 = vand.u32 %v90, 4294901760
    %v1081 = vsub.f32 %v90, %v1080
    %1082 = vmatpush1.msra.mxu0 %v1081
    %v1083 = vand.u32 %v89, 4294901760
    %v1084 = vsub.f32 %v89, %v1083
    %1085 = vmatprep.subr.mxu0 %v1084
    %v1086 = vand.u32 %v88, 4294901760
    %v1087 = vsub.f32 %v88, %v1086
    %1088 = vmatpush1.msra.mxu0 %v1087
    %v1089 = vand.u32 %v87, 4294901760
    %v1090 = vsub.f32 %v87, %v1089
    %1091 = vmatprep.subr.mxu0 %v1090
    %v1092 = vand.u32 %v86, 4294901760
    %v1093 = vsub.f32 %v86, %v1092
    %1094 = vmatpush1.msra.mxu0 %v1093
    %1095 = vmatprep.subr.mxu0 0.0
    %1096 = vmatpush2.msra.mxu0 0.0
    %1097 = vmatprep.subr.mxu0 0.0
    %1098 = vmatpush2.msra.mxu0 0.0
    %1099 = vmatprep.subr.mxu0 0.0
    %1100 = vmatpush2.msra.mxu0 0.0
    %1101 = vmatprep.subr.mxu0 0.0
    %1102 = vmatpush2.msra.mxu0 0.0
    %1103 = vmatprep.subr.mxu0 0.0
    %1104 = vmatpush2.msra.mxu0 0.0
    %1105 = vmatprep.subr.mxu0 0.0
    %1106 = vmatpush2.msra.mxu0 0.0
    %1107 = vmatprep.subr.mxu0 0.0
    %1108 = vmatpush2.msra.mxu0 0.0
    %1109 = vmatprep.subr.mxu0 0.0
    %1110 = vmatpush2.msra.mxu0 0.0
    %1111 = vmatprep.subr.mxu0 0.0
    %1112 = vmatpush2.msra.mxu0 0.0
    %1113 = vmatprep.subr.mxu0 0.0
    %1114 = vmatpush2.msra.mxu0 0.0
    %1115 = vmatprep.subr.mxu0 0.0
    %1116 = vmatpush2.msra.mxu0 0.0
    %1117 = vmatprep.subr.mxu0 0.0
    %1118 = vmatpush2.msra.mxu0 0.0
    %1119 = vmatprep.subr.mxu0 0.0
    %1120 = vmatpush2.msra.mxu0 0.0
    %1121 = vmatprep.subr.mxu0 0.0
    %1122 = vmatpush2.msra.mxu0 0.0
    %1123 = vmatprep.subr.mxu0 0.0
    %1124 = vmatpush2.msra.mxu0 0.0
    %1125 = vmatprep.subr.mxu0 0.0
    %1126 = vmatpush2.msra.mxu0 0.0
    %1127 = vmatprep.mubr.f32.mxu0 0.0
    %v1128 = vand.u32 %v647, 4294901760
    %v1129 = vsub.f32 %v647, %v1128
    %1130 = vmatmul.mubr.f32.gmra.mxu0 %v1129
    %v1131 = vpop.f32.mrf.mxu0
    %v1132 = vadd.f32 %v995, %v1131
    %v1133 = vpop.f32.mrf.mxu0
    %v1134 = vadd.f32 %v997, %v1133
    %1135 = vdwg.mxu0
    %v1136 = vand.u32 %v117, 4294901760
    %1137 = vmatprep.subr.mxu0 %v1136
    %v1138 = vand.u32 %v116, 4294901760
    %1139 = vmatpush1.msra.mxu0 %v1138
    %v1140 = vand.u32 %v115, 4294901760
    %1141 = vmatprep.subr.mxu0 %v1140
    %v1142 = vand.u32 %v114, 4294901760
    %1143 = vmatpush1.msra.mxu0 %v1142
    %v1144 = vand.u32 %v113, 4294901760
    %1145 = vmatprep.subr.mxu0 %v1144
    %v1146 = vand.u32 %v112, 4294901760
    %1147 = vmatpush1.msra.mxu0 %v1146
    %v1148 = vand.u32 %v111, 4294901760
    %1149 = vmatprep.subr.mxu0 %v1148
    %v1150 = vand.u32 %v110, 4294901760
    %1151 = vmatpush1.msra.mxu0 %v1150
    %v1152 = vand.u32 %v109, 4294901760
    %1153 = vmatprep.subr.mxu0 %v1152
    %v1154 = vand.u32 %v108, 4294901760
    %1155 = vmatpush1.msra.mxu0 %v1154
    %v1156 = vand.u32 %v107, 4294901760
    %1157 = vmatprep.subr.mxu0 %v1156
    %v1158 = vand.u32 %v106, 4294901760
    %1159 = vmatpush1.msra.mxu0 %v1158
    %v1160 = vand.u32 %v105, 4294901760
    %1161 = vmatprep.subr.mxu0 %v1160
    %v1162 = vand.u32 %v104, 4294901760
    %1163 = vmatpush1.msra.mxu0 %v1162
    %v1164 = vand.u32 %v103, 4294901760
    %1165 = vmatprep.subr.mxu0 %v1164
    %v1166 = vand.u32 %v102, 4294901760
    %1167 = vmatpush1.msra.mxu0 %v1166
    %v1168 = vand.u32 %v101, 4294901760
    %1169 = vmatprep.subr.mxu0 %v1168
    %v1170 = vand.u32 %v100, 4294901760
    %1171 = vmatpush1.msra.mxu0 %v1170
    %v1172 = vand.u32 %v99, 4294901760
    %1173 = vmatprep.subr.mxu0 %v1172
    %v1174 = vand.u32 %v98, 4294901760
    %1175 = vmatpush1.msra.mxu0 %v1174
    %v1176 = vand.u32 %v97, 4294901760
    %1177 = vmatprep.subr.mxu0 %v1176
    %v1178 = vand.u32 %v96, 4294901760
    %1179 = vmatpush1.msra.mxu0 %v1178
    %v1180 = vand.u32 %v95, 4294901760
    %1181 = vmatprep.subr.mxu0 %v1180
    %v1182 = vand.u32 %v94, 4294901760
    %1183 = vmatpush1.msra.mxu0 %v1182
    %v1184 = vand.u32 %v93, 4294901760
    %1185 = vmatprep.subr.mxu0 %v1184
    %v1186 = vand.u32 %v92, 4294901760
    %1187 = vmatpush1.msra.mxu0 %v1186
    %v1188 = vand.u32 %v91, 4294901760
    %1189 = vmatprep.subr.mxu0 %v1188
    %v1190 = vand.u32 %v90, 4294901760
    %1191 = vmatpush1.msra.mxu0 %v1190
    %v1192 = vand.u32 %v89, 4294901760
    %1193 = vmatprep.subr.mxu0 %v1192
    %v1194 = vand.u32 %v88, 4294901760
    %1195 = vmatpush1.msra.mxu0 %v1194
    %v1196 = vand.u32 %v87, 4294901760
    %1197 = vmatprep.subr.mxu0 %v1196
    %v1198 = vand.u32 %v86, 4294901760
    %1199 = vmatpush1.msra.mxu0 %v1198
    %1200 = vmatprep.subr.mxu0 0.0
    %1201 = vmatpush2.msra.mxu0 0.0
    %1202 = vmatprep.subr.mxu0 0.0
    %1203 = vmatpush2.msra.mxu0 0.0
    %1204 = vmatprep.subr.mxu0 0.0
    %1205 = vmatpush2.msra.mxu0 0.0
    %1206 = vmatprep.subr.mxu0 0.0
    %1207 = vmatpush2.msra.mxu0 0.0
    %1208 = vmatprep.subr.mxu0 0.0
    %1209 = vmatpush2.msra.mxu0 0.0
    %1210 = vmatprep.subr.mxu0 0.0
    %1211 = vmatpush2.msra.mxu0 0.0
    %1212 = vmatprep.subr.mxu0 0.0
    %1213 = vmatpush2.msra.mxu0 0.0
    %1214 = vmatprep.subr.mxu0 0.0
    %1215 = vmatpush2.msra.mxu0 0.0
    %1216 = vmatprep.subr.mxu0 0.0
    %1217 = vmatpush2.msra.mxu0 0.0
    %1218 = vmatprep.subr.mxu0 0.0
    %1219 = vmatpush2.msra.mxu0 0.0
    %1220 = vmatprep.subr.mxu0 0.0
    %1221 = vmatpush2.msra.mxu0 0.0
    %1222 = vmatprep.subr.mxu0 0.0
    %1223 = vmatpush2.msra.mxu0 0.0
    %1224 = vmatprep.subr.mxu0 0.0
    %1225 = vmatpush2.msra.mxu0 0.0
    %1226 = vmatprep.subr.mxu0 0.0
    %1227 = vmatpush2.msra.mxu0 0.0
    %1228 = vmatprep.subr.mxu0 0.0
    %1229 = vmatpush2.msra.mxu0 0.0
    %1230 = vmatprep.subr.mxu0 0.0
    %1231 = vmatpush2.msra.mxu0 0.0
    %1232 = vmatprep.mubr.f32.mxu0 0.0
    %v1233 = vand.u32 %v647, 4294901760
    %v1234 = vsub.f32 %v647, %v1233
    %v1235 = vand.u32 %v1234, 4294901760
    %1236 = vmatmul.mubr.f32.gmra.mxu0 %v1235
    %v1237 = vpop.f32.mrf.mxu0
    %v1238 = vadd.f32 %v1132, %v1237
    %v1239 = vpop.f32.mrf.mxu0
    %v1240 = vadd.f32 %v1134, %v1239
    %1241 = vdwg.mxu0
    %v1242 = vand.u32 %v117, 4294901760
    %v1243 = vsub.f32 %v117, %v1242
    %v1244 = vand.u32 %v1243, 4294901760
    %1245 = vmatprep.subr.mxu0 %v1244
    %v1246 = vand.u32 %v116, 4294901760
    %v1247 = vsub.f32 %v116, %v1246
    %v1248 = vand.u32 %v1247, 4294901760
    %1249 = vmatpush1.msra.mxu0 %v1248
    %v1250 = vand.u32 %v115, 4294901760
    %v1251 = vsub.f32 %v115, %v1250
    %v1252 = vand.u32 %v1251, 4294901760
    %1253 = vmatprep.subr.mxu0 %v1252
    %v1254 = vand.u32 %v114, 4294901760
    %v1255 = vsub.f32 %v114, %v1254
    %v1256 = vand.u32 %v1255, 4294901760
    %1257 = vmatpush1.msra.mxu0 %v1256
    %v1258 = vand.u32 %v113, 4294901760
    %v1259 = vsub.f32 %v113, %v1258
    %v1260 = vand.u32 %v1259, 4294901760
    %1261 = vmatprep.subr.mxu0 %v1260
    %v1262 = vand.u32 %v112, 4294901760
    %v1263 = vsub.f32 %v112, %v1262
    %v1264 = vand.u32 %v1263, 4294901760
    %1265 = vmatpush1.msra.mxu0 %v1264
    %v1266 = vand.u32 %v111, 4294901760
    %v1267 = vsub.f32 %v111, %v1266
    %v1268 = vand.u32 %v1267, 4294901760
    %1269 = vmatprep.subr.mxu0 %v1268
    %v1270 = vand.u32 %v110, 4294901760
    %v1271 = vsub.f32 %v110, %v1270
    %v1272 = vand.u32 %v1271, 4294901760
    %1273 = vmatpush1.msra.mxu0 %v1272
    %v1274 = vand.u32 %v109, 4294901760
    %v1275 = vsub.f32 %v109, %v1274
    %v1276 = vand.u32 %v1275, 4294901760
    %1277 = vmatprep.subr.mxu0 %v1276
    %v1278 = vand.u32 %v108, 4294901760
    %v1279 = vsub.f32 %v108, %v1278
    %v1280 = vand.u32 %v1279, 4294901760
    %1281 = vmatpush1.msra.mxu0 %v1280
    %v1282 = vand.u32 %v107, 4294901760
    %v1283 = vsub.f32 %v107, %v1282
    %v1284 = vand.u32 %v1283, 4294901760
    %1285 = vmatprep.subr.mxu0 %v1284
    %v1286 = vand.u32 %v106, 4294901760
    %v1287 = vsub.f32 %v106, %v1286
    %v1288 = vand.u32 %v1287, 4294901760
    %1289 = vmatpush1.msra.mxu0 %v1288
    %v1290 = vand.u32 %v105, 4294901760
    %v1291 = vsub.f32 %v105, %v1290
    %v1292 = vand.u32 %v1291, 4294901760
    %1293 = vmatprep.subr.mxu0 %v1292
    %v1294 = vand.u32 %v104, 4294901760
    %v1295 = vsub.f32 %v104, %v1294
    %v1296 = vand.u32 %v1295, 4294901760
    %1297 = vmatpush1.msra.mxu0 %v1296
    %v1298 = vand.u32 %v103, 4294901760
    %v1299 = vsub.f32 %v103, %v1298
    %v1300 = vand.u32 %v1299, 4294901760
    %1301 = vmatprep.subr.mxu0 %v1300
    %v1302 = vand.u32 %v102, 4294901760
    %v1303 = vsub.f32 %v102, %v1302
    %v1304 = vand.u32 %v1303, 4294901760
    %1305 = vmatpush1.msra.mxu0 %v1304
    %v1306 = vand.u32 %v101, 4294901760
    %v1307 = vsub.f32 %v101, %v1306
    %v1308 = vand.u32 %v1307, 4294901760
    %1309 = vmatprep.subr.mxu0 %v1308
    %v1310 = vand.u32 %v100, 4294901760
    %v1311 = vsub.f32 %v100, %v1310
    %v1312 = vand.u32 %v1311, 4294901760
    %1313 = vmatpush1.msra.mxu0 %v1312
    %v1314 = vand.u32 %v99, 4294901760
    %v1315 = vsub.f32 %v99, %v1314
    %v1316 = vand.u32 %v1315, 4294901760
    %1317 = vmatprep.subr.mxu0 %v1316
    %v1318 = vand.u32 %v98, 4294901760
    %v1319 = vsub.f32 %v98, %v1318
    %v1320 = vand.u32 %v1319, 4294901760
    %1321 = vmatpush1.msra.mxu0 %v1320
    %v1322 = vand.u32 %v97, 4294901760
    %v1323 = vsub.f32 %v97, %v1322
    %v1324 = vand.u32 %v1323, 4294901760
    %1325 = vmatprep.subr.mxu0 %v1324
    %v1326 = vand.u32 %v96, 4294901760
    %v1327 = vsub.f32 %v96, %v1326
    %v1328 = vand.u32 %v1327, 4294901760
    %1329 = vmatpush1.msra.mxu0 %v1328
    %v1330 = vand.u32 %v95, 4294901760
    %v1331 = vsub.f32 %v95, %v1330
    %v1332 = vand.u32 %v1331, 4294901760
    %1333 = vmatprep.subr.mxu0 %v1332
    %v1334 = vand.u32 %v94, 4294901760
    %v1335 = vsub.f32 %v94, %v1334
    %v1336 = vand.u32 %v1335, 4294901760
    %1337 = vmatpush1.msra.mxu0 %v1336
    %v1338 = vand.u32 %v93, 4294901760
    %v1339 = vsub.f32 %v93, %v1338
    %v1340 = vand.u32 %v1339, 4294901760
    %1341 = vmatprep.subr.mxu0 %v1340
    %v1342 = vand.u32 %v92, 4294901760
    %v1343 = vsub.f32 %v92, %v1342
    %v1344 = vand.u32 %v1343, 4294901760
    %1345 = vmatpush1.msra.mxu0 %v1344
    %v1346 = vand.u32 %v91, 4294901760
    %v1347 = vsub.f32 %v91, %v1346
    %v1348 = vand.u32 %v1347, 4294901760
    %1349 = vmatprep.subr.mxu0 %v1348
    %v1350 = vand.u32 %v90, 4294901760
    %v1351 = vsub.f32 %v90, %v1350
    %v1352 = vand.u32 %v1351, 4294901760
    %1353 = vmatpush1.msra.mxu0 %v1352
    %v1354 = vand.u32 %v89, 4294901760
    %v1355 = vsub.f32 %v89, %v1354
    %v1356 = vand.u32 %v1355, 4294901760
    %1357 = vmatprep.subr.mxu0 %v1356
    %v1358 = vand.u32 %v88, 4294901760
    %v1359 = vsub.f32 %v88, %v1358
    %v1360 = vand.u32 %v1359, 4294901760
    %1361 = vmatpush1.msra.mxu0 %v1360
    %v1362 = vand.u32 %v87, 4294901760
    %v1363 = vsub.f32 %v87, %v1362
    %v1364 = vand.u32 %v1363, 4294901760
    %1365 = vmatprep.subr.mxu0 %v1364
    %v1366 = vand.u32 %v86, 4294901760
    %v1367 = vsub.f32 %v86, %v1366
    %v1368 = vand.u32 %v1367, 4294901760
    %1369 = vmatpush1.msra.mxu0 %v1368
    %1370 = vmatprep.subr.mxu0 0.0
    %1371 = vmatpush2.msra.mxu0 0.0
    %1372 = vmatprep.subr.mxu0 0.0
    %1373 = vmatpush2.msra.mxu0 0.0
    %1374 = vmatprep.subr.mxu0 0.0
    %1375 = vmatpush2.msra.mxu0 0.0
    %1376 = vmatprep.subr.mxu0 0.0
    %1377 = vmatpush2.msra.mxu0 0.0
    %1378 = vmatprep.subr.mxu0 0.0
    %1379 = vmatpush2.msra.mxu0 0.0
    %1380 = vmatprep.subr.mxu0 0.0
    %1381 = vmatpush2.msra.mxu0 0.0
    %1382 = vmatprep.subr.mxu0 0.0
    %1383 = vmatpush2.msra.mxu0 0.0
    %1384 = vmatprep.subr.mxu0 0.0
    %1385 = vmatpush2.msra.mxu0 0.0
    %1386 = vmatprep.subr.mxu0 0.0
    %1387 = vmatpush2.msra.mxu0 0.0
    %1388 = vmatprep.subr.mxu0 0.0
    %1389 = vmatpush2.msra.mxu0 0.0
    %1390 = vmatprep.subr.mxu0 0.0
    %1391 = vmatpush2.msra.mxu0 0.0
    %1392 = vmatprep.subr.mxu0 0.0
    %1393 = vmatpush2.msra.mxu0 0.0
    %1394 = vmatprep.subr.mxu0 0.0
    %1395 = vmatpush2.msra.mxu0 0.0
    %1396 = vmatprep.subr.mxu0 0.0
    %1397 = vmatpush2.msra.mxu0 0.0
    %1398 = vmatprep.subr.mxu0 0.0
    %1399 = vmatpush2.msra.mxu0 0.0
    %1400 = vmatprep.subr.mxu0 0.0
    %1401 = vmatpush2.msra.mxu0 0.0
    %1402 = vmatprep.mubr.f32.mxu0 0.0
    %v1403 = vand.u32 %v647, 4294901760
    %1404 = vmatmul.mubr.f32.gmra.mxu0 %v1403
    %v1405 = vpop.f32.mrf.mxu0
    %v1406 = vadd.f32 %v1238, %v1405
    %v1407 = vpop.f32.mrf.mxu0
    %v1408 = vadd.f32 %v1240, %v1407
    %1409 = vdwg.mxu0
    %v1410 = vand.u32 %v117, 4294901760
    %1411 = vmatprep.subr.mxu0 %v1410
    %v1412 = vand.u32 %v116, 4294901760
    %1413 = vmatpush1.msra.mxu0 %v1412
    %v1414 = vand.u32 %v115, 4294901760
    %1415 = vmatprep.subr.mxu0 %v1414
    %v1416 = vand.u32 %v114, 4294901760
    %1417 = vmatpush1.msra.mxu0 %v1416
    %v1418 = vand.u32 %v113, 4294901760
    %1419 = vmatprep.subr.mxu0 %v1418
    %v1420 = vand.u32 %v112, 4294901760
    %1421 = vmatpush1.msra.mxu0 %v1420
    %v1422 = vand.u32 %v111, 4294901760
    %1423 = vmatprep.subr.mxu0 %v1422
    %v1424 = vand.u32 %v110, 4294901760
    %1425 = vmatpush1.msra.mxu0 %v1424
    %v1426 = vand.u32 %v109, 4294901760
    %1427 = vmatprep.subr.mxu0 %v1426
    %v1428 = vand.u32 %v108, 4294901760
    %1429 = vmatpush1.msra.mxu0 %v1428
    %v1430 = vand.u32 %v107, 4294901760
    %1431 = vmatprep.subr.mxu0 %v1430
    %v1432 = vand.u32 %v106, 4294901760
    %1433 = vmatpush1.msra.mxu0 %v1432
    %v1434 = vand.u32 %v105, 4294901760
    %1435 = vmatprep.subr.mxu0 %v1434
    %v1436 = vand.u32 %v104, 4294901760
    %1437 = vmatpush1.msra.mxu0 %v1436
    %v1438 = vand.u32 %v103, 4294901760
    %1439 = vmatprep.subr.mxu0 %v1438
    %v1440 = vand.u32 %v102, 4294901760
    %1441 = vmatpush1.msra.mxu0 %v1440
    %v1442 = vand.u32 %v101, 4294901760
    %1443 = vmatprep.subr.mxu0 %v1442
    %v1444 = vand.u32 %v100, 4294901760
    %1445 = vmatpush1.msra.mxu0 %v1444
    %v1446 = vand.u32 %v99, 4294901760
    %1447 = vmatprep.subr.mxu0 %v1446
    %v1448 = vand.u32 %v98, 4294901760
    %1449 = vmatpush1.msra.mxu0 %v1448
    %v1450 = vand.u32 %v97, 4294901760
    %1451 = vmatprep.subr.mxu0 %v1450
    %v1452 = vand.u32 %v96, 4294901760
    %1453 = vmatpush1.msra.mxu0 %v1452
    %v1454 = vand.u32 %v95, 4294901760
    %1455 = vmatprep.subr.mxu0 %v1454
    %v1456 = vand.u32 %v94, 4294901760
    %1457 = vmatpush1.msra.mxu0 %v1456
    %v1458 = vand.u32 %v93, 4294901760
    %1459 = vmatprep.subr.mxu0 %v1458
    %v1460 = vand.u32 %v92, 4294901760
    %1461 = vmatpush1.msra.mxu0 %v1460
    %v1462 = vand.u32 %v91, 4294901760
    %1463 = vmatprep.subr.mxu0 %v1462
    %v1464 = vand.u32 %v90, 4294901760
    %1465 = vmatpush1.msra.mxu0 %v1464
    %v1466 = vand.u32 %v89, 4294901760
    %1467 = vmatprep.subr.mxu0 %v1466
    %v1468 = vand.u32 %v88, 4294901760
    %1469 = vmatpush1.msra.mxu0 %v1468
    %v1470 = vand.u32 %v87, 4294901760
    %1471 = vmatprep.subr.mxu0 %v1470
    %v1472 = vand.u32 %v86, 4294901760
    %1473 = vmatpush1.msra.mxu0 %v1472
    %1474 = vmatprep.subr.mxu0 0.0
    %1475 = vmatpush2.msra.mxu0 0.0
    %1476 = vmatprep.subr.mxu0 0.0
    %1477 = vmatpush2.msra.mxu0 0.0
    %1478 = vmatprep.subr.mxu0 0.0
    %1479 = vmatpush2.msra.mxu0 0.0
    %1480 = vmatprep.subr.mxu0 0.0
    %1481 = vmatpush2.msra.mxu0 0.0
    %1482 = vmatprep.subr.mxu0 0.0
    %1483 = vmatpush2.msra.mxu0 0.0
    %1484 = vmatprep.subr.mxu0 0.0
    %1485 = vmatpush2.msra.mxu0 0.0
    %1486 = vmatprep.subr.mxu0 0.0
    %1487 = vmatpush2.msra.mxu0 0.0
    %1488 = vmatprep.subr.mxu0 0.0
    %1489 = vmatpush2.msra.mxu0 0.0
    %1490 = vmatprep.subr.mxu0 0.0
    %1491 = vmatpush2.msra.mxu0 0.0
    %1492 = vmatprep.subr.mxu0 0.0
    %1493 = vmatpush2.msra.mxu0 0.0
    %1494 = vmatprep.subr.mxu0 0.0
    %1495 = vmatpush2.msra.mxu0 0.0
    %1496 = vmatprep.subr.mxu0 0.0
    %1497 = vmatpush2.msra.mxu0 0.0
    %1498 = vmatprep.subr.mxu0 0.0
    %1499 = vmatpush2.msra.mxu0 0.0
    %1500 = vmatprep.subr.mxu0 0.0
    %1501 = vmatpush2.msra.mxu0 0.0
    %1502 = vmatprep.subr.mxu0 0.0
    %1503 = vmatpush2.msra.mxu0 0.0
    %1504 = vmatprep.subr.mxu0 0.0
    %1505 = vmatpush2.msra.mxu0 0.0
    %1506 = vmatprep.mubr.f32.mxu0 0.0
    %v1507 = vand.u32 %v647, 4294901760
    %1508 = vmatmul.mubr.f32.gmra.mxu0 %v1507
    %v1509 = vpop.f32.mrf.mxu0
    %v1510 = vadd.f32 %v1406, %v1509
    %v1511 = vpop.f32.mrf.mxu0
    %v1512 = vadd.f32 %v1408, %v1511
    %1513 = vdwg.mxu0
    %v1514 = vmax.f32 %v1510, 0.0
    %v1515 = vmax.f32 %v1512, 0.0
    %v1517 = vlaneseq
    %v1518 = vshrl.u32 %v1517, 7
    %v1519 = vsub.s32 0, %v1518
    %v1520 = vrot.slane %v151, %v1519
    %1522 = vmatprep.subr.mxu0 0.0
    %v1523 = vand.u32 %v134, 4294901760
    %1524 = vmatpush1.msra.mxu0 %v1523
    %1525 = vmatprep.subr.mxu0 0.0
    %v1526 = vand.u32 %v133, 4294901760
    %1527 = vmatpush1.msra.mxu0 %v1526
    %1528 = vmatprep.subr.mxu0 0.0
    %v1529 = vand.u32 %v132, 4294901760
    %1530 = vmatpush1.msra.mxu0 %v1529
    %1531 = vmatprep.subr.mxu0 0.0
    %v1532 = vand.u32 %v131, 4294901760
    %1533 = vmatpush1.msra.mxu0 %v1532
    %1534 = vmatprep.subr.mxu0 0.0
    %v1535 = vand.u32 %v130, 4294901760
    %1536 = vmatpush1.msra.mxu0 %v1535
    %1537 = vmatprep.subr.mxu0 0.0
    %v1538 = vand.u32 %v129, 4294901760
    %1539 = vmatpush1.msra.mxu0 %v1538
    %1540 = vmatprep.subr.mxu0 0.0
    %v1541 = vand.u32 %v128, 4294901760
    %1542 = vmatpush1.msra.mxu0 %v1541
    %1543 = vmatprep.subr.mxu0 0.0
    %v1544 = vand.u32 %v127, 4294901760
    %1545 = vmatpush1.msra.mxu0 %v1544
    %1546 = vmatprep.subr.mxu0 0.0
    %v1547 = vand.u32 %v126, 4294901760
    %1548 = vmatpush1.msra.mxu0 %v1547
    %1549 = vmatprep.subr.mxu0 0.0
    %v1550 = vand.u32 %v125, 4294901760
    %1551 = vmatpush1.msra.mxu0 %v1550
    %1552 = vmatprep.subr.mxu0 0.0
    %v1553 = vand.u32 %v124, 4294901760
    %1554 = vmatpush1.msra.mxu0 %v1553
    %1555 = vmatprep.subr.mxu0 0.0
    %v1556 = vand.u32 %v123, 4294901760
    %1557 = vmatpush1.msra.mxu0 %v1556
    %1558 = vmatprep.subr.mxu0 0.0
    %v1559 = vand.u32 %v122, 4294901760
    %1560 = vmatpush1.msra.mxu0 %v1559
    %1561 = vmatprep.subr.mxu0 0.0
    %v1562 = vand.u32 %v121, 4294901760
    %1563 = vmatpush1.msra.mxu0 %v1562
    %1564 = vmatprep.subr.mxu0 0.0
    %v1565 = vand.u32 %v120, 4294901760
    %1566 = vmatpush1.msra.mxu0 %v1565
    %1567 = vmatprep.subr.mxu0 0.0
    %v1568 = vand.u32 %v119, 4294901760
    %1569 = vmatpush1.msra.mxu0 %v1568
    %1570 = vmatprep.subr.mxu0 0.0
    %v1571 = vand.u32 %v150, 4294901760
    %1572 = vmatpush2.msra.mxu0 %v1571
    %1573 = vmatprep.subr.mxu0 0.0
    %v1574 = vand.u32 %v149, 4294901760
    %1575 = vmatpush2.msra.mxu0 %v1574
    %1576 = vmatprep.subr.mxu0 0.0
    %v1577 = vand.u32 %v148, 4294901760
    %1578 = vmatpush2.msra.mxu0 %v1577
    %1579 = vmatprep.subr.mxu0 0.0
    %v1580 = vand.u32 %v147, 4294901760
    %1581 = vmatpush2.msra.mxu0 %v1580
    %1582 = vmatprep.subr.mxu0 0.0
    %v1583 = vand.u32 %v146, 4294901760
    %1584 = vmatpush2.msra.mxu0 %v1583
    %1585 = vmatprep.subr.mxu0 0.0
    %v1586 = vand.u32 %v145, 4294901760
    %1587 = vmatpush2.msra.mxu0 %v1586
    %1588 = vmatprep.subr.mxu0 0.0
    %v1589 = vand.u32 %v144, 4294901760
    %1590 = vmatpush2.msra.mxu0 %v1589
    %1591 = vmatprep.subr.mxu0 0.0
    %v1592 = vand.u32 %v143, 4294901760
    %1593 = vmatpush2.msra.mxu0 %v1592
    %1594 = vmatprep.subr.mxu0 0.0
    %v1595 = vand.u32 %v142, 4294901760
    %1596 = vmatpush2.msra.mxu0 %v1595
    %1597 = vmatprep.subr.mxu0 0.0
    %v1598 = vand.u32 %v141, 4294901760
    %1599 = vmatpush2.msra.mxu0 %v1598
    %1600 = vmatprep.subr.mxu0 0.0
    %v1601 = vand.u32 %v140, 4294901760
    %1602 = vmatpush2.msra.mxu0 %v1601
    %1603 = vmatprep.subr.mxu0 0.0
    %v1604 = vand.u32 %v139, 4294901760
    %1605 = vmatpush2.msra.mxu0 %v1604
    %1606 = vmatprep.subr.mxu0 0.0
    %v1607 = vand.u32 %v138, 4294901760
    %1608 = vmatpush2.msra.mxu0 %v1607
    %1609 = vmatprep.subr.mxu0 0.0
    %v1610 = vand.u32 %v137, 4294901760
    %1611 = vmatpush2.msra.mxu0 %v1610
    %1612 = vmatprep.subr.mxu0 0.0
    %v1613 = vand.u32 %v136, 4294901760
    %1614 = vmatpush2.msra.mxu0 %v1613
    %1615 = vmatprep.subr.mxu0 0.0
    %v1616 = vand.u32 %v135, 4294901760
    %1617 = vmatpush2.msra.mxu0 %v1616
    %v1618 = vand.u32 %v1515, 4294901760
    %v1619 = vsub.f32 %v1515, %v1618
    %v1620 = vand.u32 %v1619, 4294901760
    %v1621 = vsub.f32 %v1619, %v1620
    %v1622 = vand.u32 %v1621, 4294901760
    %1623 = vmatprep.mubr.f32.mxu0 %v1622
    %v1624 = vand.u32 %v1514, 4294901760
    %v1625 = vsub.f32 %v1514, %v1624
    %v1626 = vand.u32 %v1625, 4294901760
    %v1627 = vsub.f32 %v1625, %v1626
    %v1628 = vand.u32 %v1627, 4294901760
    %1629 = vmatmul.mubr.f32.gmra.mxu0 %v1628
    %v1630 = vpop.f32.mrf.mxu0
    %v1631 = vadd.f32 %v1520, %v1630
    %v1632 = vpop.f32.mrf.mxu0
    %1633 = vdwg.mxu0
    %1634 = vmatprep.subr.mxu0 0.0
    %v1635 = vand.u32 %v134, 4294901760
    %v1636 = vsub.f32 %v134, %v1635
    %v1637 = vand.u32 %v1636, 4294901760
    %v1638 = vsub.f32 %v1636, %v1637
    %v1639 = vand.u32 %v1638, 4294901760
    %1640 = vmatpush1.msra.mxu0 %v1639
    %1641 = vmatprep.subr.mxu0 0.0
    %v1642 = vand.u32 %v133, 4294901760
    %v1643 = vsub.f32 %v133, %v1642
    %v1644 = vand.u32 %v1643, 4294901760
    %v1645 = vsub.f32 %v1643, %v1644
    %v1646 = vand.u32 %v1645, 4294901760
    %1647 = vmatpush1.msra.mxu0 %v1646
    %1648 = vmatprep.subr.mxu0 0.0
    %v1649 = vand.u32 %v132, 4294901760
    %v1650 = vsub.f32 %v132, %v1649
    %v1651 = vand.u32 %v1650, 4294901760
    %v1652 = vsub.f32 %v1650, %v1651
    %v1653 = vand.u32 %v1652, 4294901760
    %1654 = vmatpush1.msra.mxu0 %v1653
    %1655 = vmatprep.subr.mxu0 0.0
    %v1656 = vand.u32 %v131, 4294901760
    %v1657 = vsub.f32 %v131, %v1656
    %v1658 = vand.u32 %v1657, 4294901760
    %v1659 = vsub.f32 %v1657, %v1658
    %v1660 = vand.u32 %v1659, 4294901760
    %1661 = vmatpush1.msra.mxu0 %v1660
    %1662 = vmatprep.subr.mxu0 0.0
    %v1663 = vand.u32 %v130, 4294901760
    %v1664 = vsub.f32 %v130, %v1663
    %v1665 = vand.u32 %v1664, 4294901760
    %v1666 = vsub.f32 %v1664, %v1665
    %v1667 = vand.u32 %v1666, 4294901760
    %1668 = vmatpush1.msra.mxu0 %v1667
    %1669 = vmatprep.subr.mxu0 0.0
    %v1670 = vand.u32 %v129, 4294901760
    %v1671 = vsub.f32 %v129, %v1670
    %v1672 = vand.u32 %v1671, 4294901760
    %v1673 = vsub.f32 %v1671, %v1672
    %v1674 = vand.u32 %v1673, 4294901760
    %1675 = vmatpush1.msra.mxu0 %v1674
    %1676 = vmatprep.subr.mxu0 0.0
    %v1677 = vand.u32 %v128, 4294901760
    %v1678 = vsub.f32 %v128, %v1677
    %v1679 = vand.u32 %v1678, 4294901760
    %v1680 = vsub.f32 %v1678, %v1679
    %v1681 = vand.u32 %v1680, 4294901760
    %1682 = vmatpush1.msra.mxu0 %v1681
    %1683 = vmatprep.subr.mxu0 0.0
    %v1684 = vand.u32 %v127, 4294901760
    %v1685 = vsub.f32 %v127, %v1684
    %v1686 = vand.u32 %v1685, 4294901760
    %v1687 = vsub.f32 %v1685, %v1686
    %v1688 = vand.u32 %v1687, 4294901760
    %1689 = vmatpush1.msra.mxu0 %v1688
    %1690 = vmatprep.subr.mxu0 0.0
    %v1691 = vand.u32 %v126, 4294901760
    %v1692 = vsub.f32 %v126, %v1691
    %v1693 = vand.u32 %v1692, 4294901760
    %v1694 = vsub.f32 %v1692, %v1693
    %v1695 = vand.u32 %v1694, 4294901760
    %1696 = vmatpush1.msra.mxu0 %v1695
    %1697 = vmatprep.subr.mxu0 0.0
    %v1698 = vand.u32 %v125, 4294901760
    %v1699 = vsub.f32 %v125, %v1698
    %v1700 = vand.u32 %v1699, 4294901760
    %v1701 = vsub.f32 %v1699, %v1700
    %v1702 = vand.u32 %v1701, 4294901760
    %1703 = vmatpush1.msra.mxu0 %v1702
    %1704 = vmatprep.subr.mxu0 0.0
    %v1705 = vand.u32 %v124, 4294901760
    %v1706 = vsub.f32 %v124, %v1705
    %v1707 = vand.u32 %v1706, 4294901760
    %v1708 = vsub.f32 %v1706, %v1707
    %v1709 = vand.u32 %v1708, 4294901760
    %1710 = vmatpush1.msra.mxu0 %v1709
    %1711 = vmatprep.subr.mxu0 0.0
    %v1712 = vand.u32 %v123, 4294901760
    %v1713 = vsub.f32 %v123, %v1712
    %v1714 = vand.u32 %v1713, 4294901760
    %v1715 = vsub.f32 %v1713, %v1714
    %v1716 = vand.u32 %v1715, 4294901760
    %1717 = vmatpush1.msra.mxu0 %v1716
    %1718 = vmatprep.subr.mxu0 0.0
    %v1719 = vand.u32 %v122, 4294901760
    %v1720 = vsub.f32 %v122, %v1719
    %v1721 = vand.u32 %v1720, 4294901760
    %v1722 = vsub.f32 %v1720, %v1721
    %v1723 = vand.u32 %v1722, 4294901760
    %1724 = vmatpush1.msra.mxu0 %v1723
    %1725 = vmatprep.subr.mxu0 0.0
    %v1726 = vand.u32 %v121, 4294901760
    %v1727 = vsub.f32 %v121, %v1726
    %v1728 = vand.u32 %v1727, 4294901760
    %v1729 = vsub.f32 %v1727, %v1728
    %v1730 = vand.u32 %v1729, 4294901760
    %1731 = vmatpush1.msra.mxu0 %v1730
    %1732 = vmatprep.subr.mxu0 0.0
    %v1733 = vand.u32 %v120, 4294901760
    %v1734 = vsub.f32 %v120, %v1733
    %v1735 = vand.u32 %v1734, 4294901760
    %v1736 = vsub.f32 %v1734, %v1735
    %v1737 = vand.u32 %v1736, 4294901760
    %1738 = vmatpush1.msra.mxu0 %v1737
    %1739 = vmatprep.subr.mxu0 0.0
    %v1740 = vand.u32 %v119, 4294901760
    %v1741 = vsub.f32 %v119, %v1740
    %v1742 = vand.u32 %v1741, 4294901760
    %v1743 = vsub.f32 %v1741, %v1742
    %v1744 = vand.u32 %v1743, 4294901760
    %1745 = vmatpush1.msra.mxu0 %v1744
    %1746 = vmatprep.subr.mxu0 0.0
    %v1747 = vand.u32 %v150, 4294901760
    %v1748 = vsub.f32 %v150, %v1747
    %v1749 = vand.u32 %v1748, 4294901760
    %v1750 = vsub.f32 %v1748, %v1749
    %v1751 = vand.u32 %v1750, 4294901760
    %1752 = vmatpush2.msra.mxu0 %v1751
    %1753 = vmatprep.subr.mxu0 0.0
    %v1754 = vand.u32 %v149, 4294901760
    %v1755 = vsub.f32 %v149, %v1754
    %v1756 = vand.u32 %v1755, 4294901760
    %v1757 = vsub.f32 %v1755, %v1756
    %v1758 = vand.u32 %v1757, 4294901760
    %1759 = vmatpush2.msra.mxu0 %v1758
    %1760 = vmatprep.subr.mxu0 0.0
    %v1761 = vand.u32 %v148, 4294901760
    %v1762 = vsub.f32 %v148, %v1761
    %v1763 = vand.u32 %v1762, 4294901760
    %v1764 = vsub.f32 %v1762, %v1763
    %v1765 = vand.u32 %v1764, 4294901760
    %1766 = vmatpush2.msra.mxu0 %v1765
    %1767 = vmatprep.subr.mxu0 0.0
    %v1768 = vand.u32 %v147, 4294901760
    %v1769 = vsub.f32 %v147, %v1768
    %v1770 = vand.u32 %v1769, 4294901760
    %v1771 = vsub.f32 %v1769, %v1770
    %v1772 = vand.u32 %v1771, 4294901760
    %1773 = vmatpush2.msra.mxu0 %v1772
    %1774 = vmatprep.subr.mxu0 0.0
    %v1775 = vand.u32 %v146, 4294901760
    %v1776 = vsub.f32 %v146, %v1775
    %v1777 = vand.u32 %v1776, 4294901760
    %v1778 = vsub.f32 %v1776, %v1777
    %v1779 = vand.u32 %v1778, 4294901760
    %1780 = vmatpush2.msra.mxu0 %v1779
    %1781 = vmatprep.subr.mxu0 0.0
    %v1782 = vand.u32 %v145, 4294901760
    %v1783 = vsub.f32 %v145, %v1782
    %v1784 = vand.u32 %v1783, 4294901760
    %v1785 = vsub.f32 %v1783, %v1784
    %v1786 = vand.u32 %v1785, 4294901760
    %1787 = vmatpush2.msra.mxu0 %v1786
    %1788 = vmatprep.subr.mxu0 0.0
    %v1789 = vand.u32 %v144, 4294901760
    %v1790 = vsub.f32 %v144, %v1789
    %v1791 = vand.u32 %v1790, 4294901760
    %v1792 = vsub.f32 %v1790, %v1791
    %v1793 = vand.u32 %v1792, 4294901760
    %1794 = vmatpush2.msra.mxu0 %v1793
    %1795 = vmatprep.subr.mxu0 0.0
    %v1796 = vand.u32 %v143, 4294901760
    %v1797 = vsub.f32 %v143, %v1796
    %v1798 = vand.u32 %v1797, 4294901760
    %v1799 = vsub.f32 %v1797, %v1798
    %v1800 = vand.u32 %v1799, 4294901760
    %1801 = vmatpush2.msra.mxu0 %v1800
    %1802 = vmatprep.subr.mxu0 0.0
    %v1803 = vand.u32 %v142, 4294901760
    %v1804 = vsub.f32 %v142, %v1803
    %v1805 = vand.u32 %v1804, 4294901760
    %v1806 = vsub.f32 %v1804, %v1805
    %v1807 = vand.u32 %v1806, 4294901760
    %1808 = vmatpush2.msra.mxu0 %v1807
    %1809 = vmatprep.subr.mxu0 0.0
    %v1810 = vand.u32 %v141, 4294901760
    %v1811 = vsub.f32 %v141, %v1810
    %v1812 = vand.u32 %v1811, 4294901760
    %v1813 = vsub.f32 %v1811, %v1812
    %v1814 = vand.u32 %v1813, 4294901760
    %1815 = vmatpush2.msra.mxu0 %v1814
    %1816 = vmatprep.subr.mxu0 0.0
    %v1817 = vand.u32 %v140, 4294901760
    %v1818 = vsub.f32 %v140, %v1817
    %v1819 = vand.u32 %v1818, 4294901760
    %v1820 = vsub.f32 %v1818, %v1819
    %v1821 = vand.u32 %v1820, 4294901760
    %1822 = vmatpush2.msra.mxu0 %v1821
    %1823 = vmatprep.subr.mxu0 0.0
    %v1824 = vand.u32 %v139, 4294901760
    %v1825 = vsub.f32 %v139, %v1824
    %v1826 = vand.u32 %v1825, 4294901760
    %v1827 = vsub.f32 %v1825, %v1826
    %v1828 = vand.u32 %v1827, 4294901760
    %1829 = vmatpush2.msra.mxu0 %v1828
    %1830 = vmatprep.subr.mxu0 0.0
    %v1831 = vand.u32 %v138, 4294901760
    %v1832 = vsub.f32 %v138, %v1831
    %v1833 = vand.u32 %v1832, 4294901760
    %v1834 = vsub.f32 %v1832, %v1833
    %v1835 = vand.u32 %v1834, 4294901760
    %1836 = vmatpush2.msra.mxu0 %v1835
    %1837 = vmatprep.subr.mxu0 0.0
    %v1838 = vand.u32 %v137, 4294901760
    %v1839 = vsub.f32 %v137, %v1838
    %v1840 = vand.u32 %v1839, 4294901760
    %v1841 = vsub.f32 %v1839, %v1840
    %v1842 = vand.u32 %v1841, 4294901760
    %1843 = vmatpush2.msra.mxu0 %v1842
    %1844 = vmatprep.subr.mxu0 0.0
    %v1845 = vand.u32 %v136, 4294901760
    %v1846 = vsub.f32 %v136, %v1845
    %v1847 = vand.u32 %v1846, 4294901760
    %v1848 = vsub.f32 %v1846, %v1847
    %v1849 = vand.u32 %v1848, 4294901760
    %1850 = vmatpush2.msra.mxu0 %v1849
    %1851 = vmatprep.subr.mxu0 0.0
    %v1852 = vand.u32 %v135, 4294901760
    %v1853 = vsub.f32 %v135, %v1852
    %v1854 = vand.u32 %v1853, 4294901760
    %v1855 = vsub.f32 %v1853, %v1854
    %v1856 = vand.u32 %v1855, 4294901760
    %1857 = vmatpush2.msra.mxu0 %v1856
    %v1858 = vand.u32 %v1515, 4294901760
    %1859 = vmatprep.mubr.f32.mxu0 %v1858
    %v1860 = vand.u32 %v1514, 4294901760
    %1861 = vmatmul.mubr.f32.gmra.mxu0 %v1860
    %v1862 = vpop.f32.mrf.mxu0
    %v1863 = vadd.f32 %v1631, %v1862
    %v1864 = vpop.f32.mrf.mxu0
    %1865 = vdwg.mxu0
    %1866 = vmatprep.subr.mxu0 0.0
    %v1867 = vand.u32 %v134, 4294901760
    %v1868 = vsub.f32 %v134, %v1867
    %1869 = vmatpush1.msra.mxu0 %v1868
    %1870 = vmatprep.subr.mxu0 0.0
    %v1871 = vand.u32 %v133, 4294901760
    %v1872 = vsub.f32 %v133, %v1871
    %1873 = vmatpush1.msra.mxu0 %v1872
    %1874 = vmatprep.subr.mxu0 0.0
    %v1875 = vand.u32 %v132, 4294901760
    %v1876 = vsub.f32 %v132, %v1875
    %1877 = vmatpush1.msra.mxu0 %v1876
    %1878 = vmatprep.subr.mxu0 0.0
    %v1879 = vand.u32 %v131, 4294901760
    %v1880 = vsub.f32 %v131, %v1879
    %1881 = vmatpush1.msra.mxu0 %v1880
    %1882 = vmatprep.subr.mxu0 0.0
    %v1883 = vand.u32 %v130, 4294901760
    %v1884 = vsub.f32 %v130, %v1883
    %1885 = vmatpush1.msra.mxu0 %v1884
    %1886 = vmatprep.subr.mxu0 0.0
    %v1887 = vand.u32 %v129, 4294901760
    %v1888 = vsub.f32 %v129, %v1887
    %1889 = vmatpush1.msra.mxu0 %v1888
    %1890 = vmatprep.subr.mxu0 0.0
    %v1891 = vand.u32 %v128, 4294901760
    %v1892 = vsub.f32 %v128, %v1891
    %1893 = vmatpush1.msra.mxu0 %v1892
    %1894 = vmatprep.subr.mxu0 0.0
    %v1895 = vand.u32 %v127, 4294901760
    %v1896 = vsub.f32 %v127, %v1895
    %1897 = vmatpush1.msra.mxu0 %v1896
    %1898 = vmatprep.subr.mxu0 0.0
    %v1899 = vand.u32 %v126, 4294901760
    %v1900 = vsub.f32 %v126, %v1899
    %1901 = vmatpush1.msra.mxu0 %v1900
    %1902 = vmatprep.subr.mxu0 0.0
    %v1903 = vand.u32 %v125, 4294901760
    %v1904 = vsub.f32 %v125, %v1903
    %1905 = vmatpush1.msra.mxu0 %v1904
    %1906 = vmatprep.subr.mxu0 0.0
    %v1907 = vand.u32 %v124, 4294901760
    %v1908 = vsub.f32 %v124, %v1907
    %1909 = vmatpush1.msra.mxu0 %v1908
    %1910 = vmatprep.subr.mxu0 0.0
    %v1911 = vand.u32 %v123, 4294901760
    %v1912 = vsub.f32 %v123, %v1911
    %1913 = vmatpush1.msra.mxu0 %v1912
    %1914 = vmatprep.subr.mxu0 0.0
    %v1915 = vand.u32 %v122, 4294901760
    %v1916 = vsub.f32 %v122, %v1915
    %1917 = vmatpush1.msra.mxu0 %v1916
    %1918 = vmatprep.subr.mxu0 0.0
    %v1919 = vand.u32 %v121, 4294901760
    %v1920 = vsub.f32 %v121, %v1919
    %1921 = vmatpush1.msra.mxu0 %v1920
    %1922 = vmatprep.subr.mxu0 0.0
    %v1923 = vand.u32 %v120, 4294901760
    %v1924 = vsub.f32 %v120, %v1923
    %1925 = vmatpush1.msra.mxu0 %v1924
    %1926 = vmatprep.subr.mxu0 0.0
    %v1927 = vand.u32 %v119, 4294901760
    %v1928 = vsub.f32 %v119, %v1927
    %1929 = vmatpush1.msra.mxu0 %v1928
    %1930 = vmatprep.subr.mxu0 0.0
    %v1931 = vand.u32 %v150, 4294901760
    %v1932 = vsub.f32 %v150, %v1931
    %1933 = vmatpush2.msra.mxu0 %v1932
    %1934 = vmatprep.subr.mxu0 0.0
    %v1935 = vand.u32 %v149, 4294901760
    %v1936 = vsub.f32 %v149, %v1935
    %1937 = vmatpush2.msra.mxu0 %v1936
    %1938 = vmatprep.subr.mxu0 0.0
    %v1939 = vand.u32 %v148, 4294901760
    %v1940 = vsub.f32 %v148, %v1939
    %1941 = vmatpush2.msra.mxu0 %v1940
    %1942 = vmatprep.subr.mxu0 0.0
    %v1943 = vand.u32 %v147, 4294901760
    %v1944 = vsub.f32 %v147, %v1943
    %1945 = vmatpush2.msra.mxu0 %v1944
    %1946 = vmatprep.subr.mxu0 0.0
    %v1947 = vand.u32 %v146, 4294901760
    %v1948 = vsub.f32 %v146, %v1947
    %1949 = vmatpush2.msra.mxu0 %v1948
    %1950 = vmatprep.subr.mxu0 0.0
    %v1951 = vand.u32 %v145, 4294901760
    %v1952 = vsub.f32 %v145, %v1951
    %1953 = vmatpush2.msra.mxu0 %v1952
    %1954 = vmatprep.subr.mxu0 0.0
    %v1955 = vand.u32 %v144, 4294901760
    %v1956 = vsub.f32 %v144, %v1955
    %1957 = vmatpush2.msra.mxu0 %v1956
    %1958 = vmatprep.subr.mxu0 0.0
    %v1959 = vand.u32 %v143, 4294901760
    %v1960 = vsub.f32 %v143, %v1959
    %1961 = vmatpush2.msra.mxu0 %v1960
    %1962 = vmatprep.subr.mxu0 0.0
    %v1963 = vand.u32 %v142, 4294901760
    %v1964 = vsub.f32 %v142, %v1963
    %1965 = vmatpush2.msra.mxu0 %v1964
    %1966 = vmatprep.subr.mxu0 0.0
    %v1967 = vand.u32 %v141, 4294901760
    %v1968 = vsub.f32 %v141, %v1967
    %1969 = vmatpush2.msra.mxu0 %v1968
    %1970 = vmatprep.subr.mxu0 0.0
    %v1971 = vand.u32 %v140, 4294901760
    %v1972 = vsub.f32 %v140, %v1971
    %1973 = vmatpush2.msra.mxu0 %v1972
    %1974 = vmatprep.subr.mxu0 0.0
    %v1975 = vand.u32 %v139, 4294901760
    %v1976 = vsub.f32 %v139, %v1975
    %1977 = vmatpush2.msra.mxu0 %v1976
    %1978 = vmatprep.subr.mxu0 0.0
    %v1979 = vand.u32 %v138, 4294901760
    %v1980 = vsub.f32 %v138, %v1979
    %1981 = vmatpush2.msra.mxu0 %v1980
    %1982 = vmatprep.subr.mxu0 0.0
    %v1983 = vand.u32 %v137, 4294901760
    %v1984 = vsub.f32 %v137, %v1983
    %1985 = vmatpush2.msra.mxu0 %v1984
    %1986 = vmatprep.subr.mxu0 0.0
    %v1987 = vand.u32 %v136, 4294901760
    %v1988 = vsub.f32 %v136, %v1987
    %1989 = vmatpush2.msra.mxu0 %v1988
    %1990 = vmatprep.subr.mxu0 0.0
    %v1991 = vand.u32 %v135, 4294901760
    %v1992 = vsub.f32 %v135, %v1991
    %1993 = vmatpush2.msra.mxu0 %v1992
    %v1994 = vand.u32 %v1515, 4294901760
    %v1995 = vsub.f32 %v1515, %v1994
    %1996 = vmatprep.mubr.f32.mxu0 %v1995
    %v1997 = vand.u32 %v1514, 4294901760
    %v1998 = vsub.f32 %v1514, %v1997
    %1999 = vmatmul.mubr.f32.gmra.mxu0 %v1998
    %v2000 = vpop.f32.mrf.mxu0
    %v2001 = vadd.f32 %v1863, %v2000
    %v2002 = vpop.f32.mrf.mxu0
    %2003 = vdwg.mxu0
    %2004 = vmatprep.subr.mxu0 0.0
    %v2005 = vand.u32 %v134, 4294901760
    %2006 = vmatpush1.msra.mxu0 %v2005
    %2007 = vmatprep.subr.mxu0 0.0
    %v2008 = vand.u32 %v133, 4294901760
    %2009 = vmatpush1.msra.mxu0 %v2008
    %2010 = vmatprep.subr.mxu0 0.0
    %v2011 = vand.u32 %v132, 4294901760
    %2012 = vmatpush1.msra.mxu0 %v2011
    %2013 = vmatprep.subr.mxu0 0.0
    %v2014 = vand.u32 %v131, 4294901760
    %2015 = vmatpush1.msra.mxu0 %v2014
    %2016 = vmatprep.subr.mxu0 0.0
    %v2017 = vand.u32 %v130, 4294901760
    %2018 = vmatpush1.msra.mxu0 %v2017
    %2019 = vmatprep.subr.mxu0 0.0
    %v2020 = vand.u32 %v129, 4294901760
    %2021 = vmatpush1.msra.mxu0 %v2020
    %2022 = vmatprep.subr.mxu0 0.0
    %v2023 = vand.u32 %v128, 4294901760
    %2024 = vmatpush1.msra.mxu0 %v2023
    %2025 = vmatprep.subr.mxu0 0.0
    %v2026 = vand.u32 %v127, 4294901760
    %2027 = vmatpush1.msra.mxu0 %v2026
    %2028 = vmatprep.subr.mxu0 0.0
    %v2029 = vand.u32 %v126, 4294901760
    %2030 = vmatpush1.msra.mxu0 %v2029
    %2031 = vmatprep.subr.mxu0 0.0
    %v2032 = vand.u32 %v125, 4294901760
    %2033 = vmatpush1.msra.mxu0 %v2032
    %2034 = vmatprep.subr.mxu0 0.0
    %v2035 = vand.u32 %v124, 4294901760
    %2036 = vmatpush1.msra.mxu0 %v2035
    %2037 = vmatprep.subr.mxu0 0.0
    %v2038 = vand.u32 %v123, 4294901760
    %2039 = vmatpush1.msra.mxu0 %v2038
    %2040 = vmatprep.subr.mxu0 0.0
    %v2041 = vand.u32 %v122, 4294901760
    %2042 = vmatpush1.msra.mxu0 %v2041
    %2043 = vmatprep.subr.mxu0 0.0
    %v2044 = vand.u32 %v121, 4294901760
    %2045 = vmatpush1.msra.mxu0 %v2044
    %2046 = vmatprep.subr.mxu0 0.0
    %v2047 = vand.u32 %v120, 4294901760
    %2048 = vmatpush1.msra.mxu0 %v2047
    %2049 = vmatprep.subr.mxu0 0.0
    %v2050 = vand.u32 %v119, 4294901760
    %2051 = vmatpush1.msra.mxu0 %v2050
    %2052 = vmatprep.subr.mxu0 0.0
    %v2053 = vand.u32 %v150, 4294901760
    %2054 = vmatpush2.msra.mxu0 %v2053
    %2055 = vmatprep.subr.mxu0 0.0
    %v2056 = vand.u32 %v149, 4294901760
    %2057 = vmatpush2.msra.mxu0 %v2056
    %2058 = vmatprep.subr.mxu0 0.0
    %v2059 = vand.u32 %v148, 4294901760
    %2060 = vmatpush2.msra.mxu0 %v2059
    %2061 = vmatprep.subr.mxu0 0.0
    %v2062 = vand.u32 %v147, 4294901760
    %2063 = vmatpush2.msra.mxu0 %v2062
    %2064 = vmatprep.subr.mxu0 0.0
    %v2065 = vand.u32 %v146, 4294901760
    %2066 = vmatpush2.msra.mxu0 %v2065
    %2067 = vmatprep.subr.mxu0 0.0
    %v2068 = vand.u32 %v145, 4294901760
    %2069 = vmatpush2.msra.mxu0 %v2068
    %2070 = vmatprep.subr.mxu0 0.0
    %v2071 = vand.u32 %v144, 4294901760
    %2072 = vmatpush2.msra.mxu0 %v2071
    %2073 = vmatprep.subr.mxu0 0.0
    %v2074 = vand.u32 %v143, 4294901760
    %2075 = vmatpush2.msra.mxu0 %v2074
    %2076 = vmatprep.subr.mxu0 0.0
    %v2077 = vand.u32 %v142, 4294901760
    %2078 = vmatpush2.msra.mxu0 %v2077
    %2079 = vmatprep.subr.mxu0 0.0
    %v2080 = vand.u32 %v141, 4294901760
    %2081 = vmatpush2.msra.mxu0 %v2080
    %2082 = vmatprep.subr.mxu0 0.0
    %v2083 = vand.u32 %v140, 4294901760
    %2084 = vmatpush2.msra.mxu0 %v2083
    %2085 = vmatprep.subr.mxu0 0.0
    %v2086 = vand.u32 %v139, 4294901760
    %2087 = vmatpush2.msra.mxu0 %v2086
    %2088 = vmatprep.subr.mxu0 0.0
    %v2089 = vand.u32 %v138, 4294901760
    %2090 = vmatpush2.msra.mxu0 %v2089
    %2091 = vmatprep.subr.mxu0 0.0
    %v2092 = vand.u32 %v137, 4294901760
    %2093 = vmatpush2.msra.mxu0 %v2092
    %2094 = vmatprep.subr.mxu0 0.0
    %v2095 = vand.u32 %v136, 4294901760
    %2096 = vmatpush2.msra.mxu0 %v2095
    %2097 = vmatprep.subr.mxu0 0.0
    %v2098 = vand.u32 %v135, 4294901760
    %2099 = vmatpush2.msra.mxu0 %v2098
    %v2100 = vand.u32 %v1515, 4294901760
    %v2101 = vsub.f32 %v1515, %v2100
    %v2102 = vand.u32 %v2101, 4294901760
    %2103 = vmatprep.mubr.f32.mxu0 %v2102
    %v2104 = vand.u32 %v1514, 4294901760
    %v2105 = vsub.f32 %v1514, %v2104
    %v2106 = vand.u32 %v2105, 4294901760
    %2107 = vmatmul.mubr.f32.gmra.mxu0 %v2106
    %v2108 = vpop.f32.mrf.mxu0
    %v2109 = vadd.f32 %v2001, %v2108
    %v2110 = vpop.f32.mrf.mxu0
    %2111 = vdwg.mxu0
    %2112 = vmatprep.subr.mxu0 0.0
    %v2113 = vand.u32 %v134, 4294901760
    %v2114 = vsub.f32 %v134, %v2113
    %v2115 = vand.u32 %v2114, 4294901760
    %2116 = vmatpush1.msra.mxu0 %v2115
    %2117 = vmatprep.subr.mxu0 0.0
    %v2118 = vand.u32 %v133, 4294901760
    %v2119 = vsub.f32 %v133, %v2118
    %v2120 = vand.u32 %v2119, 4294901760
    %2121 = vmatpush1.msra.mxu0 %v2120
    %2122 = vmatprep.subr.mxu0 0.0
    %v2123 = vand.u32 %v132, 4294901760
    %v2124 = vsub.f32 %v132, %v2123
    %v2125 = vand.u32 %v2124, 4294901760
    %2126 = vmatpush1.msra.mxu0 %v2125
    %2127 = vmatprep.subr.mxu0 0.0
    %v2128 = vand.u32 %v131, 4294901760
    %v2129 = vsub.f32 %v131, %v2128
    %v2130 = vand.u32 %v2129, 4294901760
    %2131 = vmatpush1.msra.mxu0 %v2130
    %2132 = vmatprep.subr.mxu0 0.0
    %v2133 = vand.u32 %v130, 4294901760
    %v2134 = vsub.f32 %v130, %v2133
    %v2135 = vand.u32 %v2134, 4294901760
    %2136 = vmatpush1.msra.mxu0 %v2135
    %2137 = vmatprep.subr.mxu0 0.0
    %v2138 = vand.u32 %v129, 4294901760
    %v2139 = vsub.f32 %v129, %v2138
    %v2140 = vand.u32 %v2139, 4294901760
    %2141 = vmatpush1.msra.mxu0 %v2140
    %2142 = vmatprep.subr.mxu0 0.0
    %v2143 = vand.u32 %v128, 4294901760
    %v2144 = vsub.f32 %v128, %v2143
    %v2145 = vand.u32 %v2144, 4294901760
    %2146 = vmatpush1.msra.mxu0 %v2145
    %2147 = vmatprep.subr.mxu0 0.0
    %v2148 = vand.u32 %v127, 4294901760
    %v2149 = vsub.f32 %v127, %v2148
    %v2150 = vand.u32 %v2149, 4294901760
    %2151 = vmatpush1.msra.mxu0 %v2150
    %2152 = vmatprep.subr.mxu0 0.0
    %v2153 = vand.u32 %v126, 4294901760
    %v2154 = vsub.f32 %v126, %v2153
    %v2155 = vand.u32 %v2154, 4294901760
    %2156 = vmatpush1.msra.mxu0 %v2155
    %2157 = vmatprep.subr.mxu0 0.0
    %v2158 = vand.u32 %v125, 4294901760
    %v2159 = vsub.f32 %v125, %v2158
    %v2160 = vand.u32 %v2159, 4294901760
    %2161 = vmatpush1.msra.mxu0 %v2160
    %2162 = vmatprep.subr.mxu0 0.0
    %v2163 = vand.u32 %v124, 4294901760
    %v2164 = vsub.f32 %v124, %v2163
    %v2165 = vand.u32 %v2164, 4294901760
    %2166 = vmatpush1.msra.mxu0 %v2165
    %2167 = vmatprep.subr.mxu0 0.0
    %v2168 = vand.u32 %v123, 4294901760
    %v2169 = vsub.f32 %v123, %v2168
    %v2170 = vand.u32 %v2169, 4294901760
    %2171 = vmatpush1.msra.mxu0 %v2170
    %2172 = vmatprep.subr.mxu0 0.0
    %v2173 = vand.u32 %v122, 4294901760
    %v2174 = vsub.f32 %v122, %v2173
    %v2175 = vand.u32 %v2174, 4294901760
    %2176 = vmatpush1.msra.mxu0 %v2175
    %2177 = vmatprep.subr.mxu0 0.0
    %v2178 = vand.u32 %v121, 4294901760
    %v2179 = vsub.f32 %v121, %v2178
    %v2180 = vand.u32 %v2179, 4294901760
    %2181 = vmatpush1.msra.mxu0 %v2180
    %2182 = vmatprep.subr.mxu0 0.0
    %v2183 = vand.u32 %v120, 4294901760
    %v2184 = vsub.f32 %v120, %v2183
    %v2185 = vand.u32 %v2184, 4294901760
    %2186 = vmatpush1.msra.mxu0 %v2185
    %2187 = vmatprep.subr.mxu0 0.0
    %v2188 = vand.u32 %v119, 4294901760
    %v2189 = vsub.f32 %v119, %v2188
    %v2190 = vand.u32 %v2189, 4294901760
    %2191 = vmatpush1.msra.mxu0 %v2190
    %2192 = vmatprep.subr.mxu0 0.0
    %v2193 = vand.u32 %v150, 4294901760
    %v2194 = vsub.f32 %v150, %v2193
    %v2195 = vand.u32 %v2194, 4294901760
    %2196 = vmatpush2.msra.mxu0 %v2195
    %2197 = vmatprep.subr.mxu0 0.0
    %v2198 = vand.u32 %v149, 4294901760
    %v2199 = vsub.f32 %v149, %v2198
    %v2200 = vand.u32 %v2199, 4294901760
    %2201 = vmatpush2.msra.mxu0 %v2200
    %2202 = vmatprep.subr.mxu0 0.0
    %v2203 = vand.u32 %v148, 4294901760
    %v2204 = vsub.f32 %v148, %v2203
    %v2205 = vand.u32 %v2204, 4294901760
    %2206 = vmatpush2.msra.mxu0 %v2205
    %2207 = vmatprep.subr.mxu0 0.0
    %v2208 = vand.u32 %v147, 4294901760
    %v2209 = vsub.f32 %v147, %v2208
    %v2210 = vand.u32 %v2209, 4294901760
    %2211 = vmatpush2.msra.mxu0 %v2210
    %2212 = vmatprep.subr.mxu0 0.0
    %v2213 = vand.u32 %v146, 4294901760
    %v2214 = vsub.f32 %v146, %v2213
    %v2215 = vand.u32 %v2214, 4294901760
    %2216 = vmatpush2.msra.mxu0 %v2215
    %2217 = vmatprep.subr.mxu0 0.0
    %v2218 = vand.u32 %v145, 4294901760
    %v2219 = vsub.f32 %v145, %v2218
    %v2220 = vand.u32 %v2219, 4294901760
    %2221 = vmatpush2.msra.mxu0 %v2220
    %2222 = vmatprep.subr.mxu0 0.0
    %v2223 = vand.u32 %v144, 4294901760
    %v2224 = vsub.f32 %v144, %v2223
    %v2225 = vand.u32 %v2224, 4294901760
    %2226 = vmatpush2.msra.mxu0 %v2225
    %2227 = vmatprep.subr.mxu0 0.0
    %v2228 = vand.u32 %v143, 4294901760
    %v2229 = vsub.f32 %v143, %v2228
    %v2230 = vand.u32 %v2229, 4294901760
    %2231 = vmatpush2.msra.mxu0 %v2230
    %2232 = vmatprep.subr.mxu0 0.0
    %v2233 = vand.u32 %v142, 4294901760
    %v2234 = vsub.f32 %v142, %v2233
    %v2235 = vand.u32 %v2234, 4294901760
    %2236 = vmatpush2.msra.mxu0 %v2235
    %2237 = vmatprep.subr.mxu0 0.0
    %v2238 = vand.u32 %v141, 4294901760
    %v2239 = vsub.f32 %v141, %v2238
    %v2240 = vand.u32 %v2239, 4294901760
    %2241 = vmatpush2.msra.mxu0 %v2240
    %2242 = vmatprep.subr.mxu0 0.0
    %v2243 = vand.u32 %v140, 4294901760
    %v2244 = vsub.f32 %v140, %v2243
    %v2245 = vand.u32 %v2244, 4294901760
    %2246 = vmatpush2.msra.mxu0 %v2245
    %2247 = vmatprep.subr.mxu0 0.0
    %v2248 = vand.u32 %v139, 4294901760
    %v2249 = vsub.f32 %v139, %v2248
    %v2250 = vand.u32 %v2249, 4294901760
    %2251 = vmatpush2.msra.mxu0 %v2250
    %2252 = vmatprep.subr.mxu0 0.0
    %v2253 = vand.u32 %v138, 4294901760
    %v2254 = vsub.f32 %v138, %v2253
    %v2255 = vand.u32 %v2254, 4294901760
    %2256 = vmatpush2.msra.mxu0 %v2255
    %2257 = vmatprep.subr.mxu0 0.0
    %v2258 = vand.u32 %v137, 4294901760
    %v2259 = vsub.f32 %v137, %v2258
    %v2260 = vand.u32 %v2259, 4294901760
    %2261 = vmatpush2.msra.mxu0 %v2260
    %2262 = vmatprep.subr.mxu0 0.0
    %v2263 = vand.u32 %v136, 4294901760
    %v2264 = vsub.f32 %v136, %v2263
    %v2265 = vand.u32 %v2264, 4294901760
    %2266 = vmatpush2.msra.mxu0 %v2265
    %2267 = vmatprep.subr.mxu0 0.0
    %v2268 = vand.u32 %v135, 4294901760
    %v2269 = vsub.f32 %v135, %v2268
    %v2270 = vand.u32 %v2269, 4294901760
    %2271 = vmatpush2.msra.mxu0 %v2270
    %v2272 = vand.u32 %v1515, 4294901760
    %2273 = vmatprep.mubr.f32.mxu0 %v2272
    %v2274 = vand.u32 %v1514, 4294901760
    %2275 = vmatmul.mubr.f32.gmra.mxu0 %v2274
    %v2276 = vpop.f32.mrf.mxu0
    %v2277 = vadd.f32 %v2109, %v2276
    %v2278 = vpop.f32.mrf.mxu0
    %2279 = vdwg.mxu0
    %2280 = vmatprep.subr.mxu0 0.0
    %v2281 = vand.u32 %v134, 4294901760
    %2282 = vmatpush1.msra.mxu0 %v2281
    %2283 = vmatprep.subr.mxu0 0.0
    %v2284 = vand.u32 %v133, 4294901760
    %2285 = vmatpush1.msra.mxu0 %v2284
    %2286 = vmatprep.subr.mxu0 0.0
    %v2287 = vand.u32 %v132, 4294901760
    %2288 = vmatpush1.msra.mxu0 %v2287
    %2289 = vmatprep.subr.mxu0 0.0
    %v2290 = vand.u32 %v131, 4294901760
    %2291 = vmatpush1.msra.mxu0 %v2290
    %2292 = vmatprep.subr.mxu0 0.0
    %v2293 = vand.u32 %v130, 4294901760
    %2294 = vmatpush1.msra.mxu0 %v2293
    %2295 = vmatprep.subr.mxu0 0.0
    %v2296 = vand.u32 %v129, 4294901760
    %2297 = vmatpush1.msra.mxu0 %v2296
    %2298 = vmatprep.subr.mxu0 0.0
    %v2299 = vand.u32 %v128, 4294901760
    %2300 = vmatpush1.msra.mxu0 %v2299
    %2301 = vmatprep.subr.mxu0 0.0
    %v2302 = vand.u32 %v127, 4294901760
    %2303 = vmatpush1.msra.mxu0 %v2302
    %2304 = vmatprep.subr.mxu0 0.0
    %v2305 = vand.u32 %v126, 4294901760
    %2306 = vmatpush1.msra.mxu0 %v2305
    %2307 = vmatprep.subr.mxu0 0.0
    %v2308 = vand.u32 %v125, 4294901760
    %2309 = vmatpush1.msra.mxu0 %v2308
    %2310 = vmatprep.subr.mxu0 0.0
    %v2311 = vand.u32 %v124, 4294901760
    %2312 = vmatpush1.msra.mxu0 %v2311
    %2313 = vmatprep.subr.mxu0 0.0
    %v2314 = vand.u32 %v123, 4294901760
    %2315 = vmatpush1.msra.mxu0 %v2314
    %2316 = vmatprep.subr.mxu0 0.0
    %v2317 = vand.u32 %v122, 4294901760
    %2318 = vmatpush1.msra.mxu0 %v2317
    %2319 = vmatprep.subr.mxu0 0.0
    %v2320 = vand.u32 %v121, 4294901760
    %2321 = vmatpush1.msra.mxu0 %v2320
    %2322 = vmatprep.subr.mxu0 0.0
    %v2323 = vand.u32 %v120, 4294901760
    %2324 = vmatpush1.msra.mxu0 %v2323
    %2325 = vmatprep.subr.mxu0 0.0
    %v2326 = vand.u32 %v119, 4294901760
    %2327 = vmatpush1.msra.mxu0 %v2326
    %2328 = vmatprep.subr.mxu0 0.0
    %v2329 = vand.u32 %v150, 4294901760
    %2330 = vmatpush2.msra.mxu0 %v2329
    %2331 = vmatprep.subr.mxu0 0.0
    %v2332 = vand.u32 %v149, 4294901760
    %2333 = vmatpush2.msra.mxu0 %v2332
    %2334 = vmatprep.subr.mxu0 0.0
    %v2335 = vand.u32 %v148, 4294901760
    %2336 = vmatpush2.msra.mxu0 %v2335
    %2337 = vmatprep.subr.mxu0 0.0
    %v2338 = vand.u32 %v147, 4294901760
    %2339 = vmatpush2.msra.mxu0 %v2338
    %2340 = vmatprep.subr.mxu0 0.0
    %v2341 = vand.u32 %v146, 4294901760
    %2342 = vmatpush2.msra.mxu0 %v2341
    %2343 = vmatprep.subr.mxu0 0.0
    %v2344 = vand.u32 %v145, 4294901760
    %2345 = vmatpush2.msra.mxu0 %v2344
    %2346 = vmatprep.subr.mxu0 0.0
    %v2347 = vand.u32 %v144, 4294901760
    %2348 = vmatpush2.msra.mxu0 %v2347
    %2349 = vmatprep.subr.mxu0 0.0
    %v2350 = vand.u32 %v143, 4294901760
    %2351 = vmatpush2.msra.mxu0 %v2350
    %2352 = vmatprep.subr.mxu0 0.0
    %v2353 = vand.u32 %v142, 4294901760
    %2354 = vmatpush2.msra.mxu0 %v2353
    %2355 = vmatprep.subr.mxu0 0.0
    %v2356 = vand.u32 %v141, 4294901760
    %2357 = vmatpush2.msra.mxu0 %v2356
    %2358 = vmatprep.subr.mxu0 0.0
    %v2359 = vand.u32 %v140, 4294901760
    %2360 = vmatpush2.msra.mxu0 %v2359
    %2361 = vmatprep.subr.mxu0 0.0
    %v2362 = vand.u32 %v139, 4294901760
    %2363 = vmatpush2.msra.mxu0 %v2362
    %2364 = vmatprep.subr.mxu0 0.0
    %v2365 = vand.u32 %v138, 4294901760
    %2366 = vmatpush2.msra.mxu0 %v2365
    %2367 = vmatprep.subr.mxu0 0.0
    %v2368 = vand.u32 %v137, 4294901760
    %2369 = vmatpush2.msra.mxu0 %v2368
    %2370 = vmatprep.subr.mxu0 0.0
    %v2371 = vand.u32 %v136, 4294901760
    %2372 = vmatpush2.msra.mxu0 %v2371
    %2373 = vmatprep.subr.mxu0 0.0
    %v2374 = vand.u32 %v135, 4294901760
    %2375 = vmatpush2.msra.mxu0 %v2374
    %v2376 = vand.u32 %v1515, 4294901760
    %2377 = vmatprep.mubr.f32.mxu0 %v2376
    %v2378 = vand.u32 %v1514, 4294901760
    %2379 = vmatmul.mubr.f32.gmra.mxu0 %v2378
    %v2380 = vpop.f32.mrf.mxu0
    %v2381 = vadd.f32 %v2277, %v2380
    %v2382 = vpop.f32.mrf.mxu0
    %2383 = vdwg.mxu0
    %2384 = vst [vmem:[#allocation10] sm:$0xff] %v2381
    // Predicated region
    $region46: #{reinf_forward_padded.1} parent=1 // pred_check
      _
    $region47: #{reinf_forward_padded.1} parent=1 // pred_check_branch
      %2386 = sbr.rel (0) target = $region49
    $region48: #{reinf_forward_padded.1} parent=1 // pred_region
      %s2388 = ssub.s32 128, 128
      %2389 = vsyncadd [#allocation4], %s2388
      %s2391 = sshll.u32 [#allocation10], 4
      %s2392 = int_to_ptr.vmem [resolvable:$true] %s2391
      %2394 = dma.vmem_to_hbm [thread:$0]  %s2392, 128, %s7, [#allocation4]
    $region49: #{reinf_forward_padded.1} parent=1 // pred_fallthru
      _
    // Predicated region
    $region50: #{reinf_forward_padded.1} parent=1 // pred_check
      _
    $region51: #{reinf_forward_padded.1} parent=1 // pred_check_branch
      %2396 = sbr.rel (0) target = $region53
    $region52: #{reinf_forward_padded.1} parent=1 // pred_region
      %2397 = dma.done [#allocation4], 128
    $region53: #{reinf_forward_padded.1} parent=1 // pred_fallthru
      _
    %2398 = vsyncpa [#allocation3], 1
    %2399 = vsyncpa [#allocation6], 1
    %2400 = vsyncpa [#allocation9], 1
    %2401 = vsyncpa [#allocation4], 1

</llo_original>
